<compile_context>
chip_gen: v6e
topology: v6e:2x2x1
jax: 0.10.0
libtpu: 0.0.40
codegen_flags: <defaults>
</compile_context>

<pallas_src>
import jax
import jax.numpy as jnp
import numpy as np
from jax import lax
from jax.experimental import pallas as pl
from jax.experimental.pallas import tpu as pltpu


# ----------------------------- Pallas kernel --------------------------------


def retain_kernel(
    # inputs
    x_ref,            # (T*B, N)  f32 (flattened in wrapper, batch padded to 8)
    h0_ref,           # (B, 2H)   = [h_vis0 | h_var0]
    w_emb_t_ref,      # (N, E)    bf16
    b_emb_ref,        # (1, E)    f32
    w_ih_cat_ref,     # (E, 6H)   bf16, gates [r_vis, r_var, z_vis, z_var, n_vis, n_var]
    b_ih_cat_ref,     # (1, 6H)   f32, b_ih (+ b_hh folded for r/z gates)
    w_hh_cat_ref,     # (2H, 6H)  f32, block-diagonal fused hidden->gates
    b_hh_n_ref,       # (1, 2H)   f32, b_hh for the n gates (kept inside r * (...))
    w_vattn_pad_ref,  # (1, 2H)   visit attention weights, zero-padded over var half
    b_vattn_ref,      # (1, 1)
    w_battn_pad_ref,  # (2H, E)   bf16, variable attention weights, zero rows over vis half
    b_battn_ref,      # (1, E)
    w_out_t_ref,      # (E, C)
    b_out_ref,        # (1, C)
    # outputs
    out_ref,          # (B, C)
    h_out_ref,        # (B, 2H)
):
    B, H2 = h0_ref.shape            # B (padded), 2H
    TB = x_ref.shape[0]
    T = TB // B
    E = w_emb_t_ref.shape[1]
    H4 = 2 * H2                     # 4H

    # --- embedding layer: v = x @ W_emb^T + b_emb  (bf16 MXU, f32 accumulate) ---
    v_flat = jnp.dot(x_ref[...].astype(jnp.bfloat16), w_emb_t_ref[...],
                     preferred_element_type=jnp.float32) + b_emb_ref[...]      # (TB, E)

    # --- hoisted input-gate projections for BOTH GRUs, all timesteps at once ---
    gx_all = jnp.dot(v_flat.astype(jnp.bfloat16), w_ih_cat_ref[...],
                     preferred_element_type=jnp.float32) + b_ih_cat_ref[...]   # (TB, 6H)

    w_hh = w_hh_cat_ref[...]                                    # (2H, 6H), f32
    b_hh_n = jnp.broadcast_to(b_hh_n_ref[...], (B, H2))         # hoisted broadcast
    w_vattn = w_vattn_pad_ref[...]                              # (1, 2H)
    b_vattn = b_vattn_ref[...]                                  # (1, 1)

    # --- fused reverse-time recurrence (both GRUs in one matmul per step) ---
    # reverse_rnn_feeding=True: iterate t = T-1 .. 0; hs[t] == torch.flip(rnn_out)[t].
    # Hidden history and attention logits stay in vregs (no VMEM scratch).
    h = h0_ref[...]                                             # (B, 2H) f32
    hs = [None] * T
    alphas = [None] * T
    for s in range(T):                                          # T static, fully unrolled
        t = T - 1 - s
        gx_t = gx_all[t * B:(t + 1) * B, :]                     # sublane-aligned static slice
        gh = jnp.dot(h, w_hh, preferred_element_type=jnp.float32)   # (B, 6H)
        rz = jax.nn.sigmoid(gx_t[:, :H4] + gh[:, :H4])          # one 4H-wide sigmoid first
        r = rz[:, :H2]
        z = rz[:, H2:]
        n = jnp.tanh(gx_t[:, H4:] + r * (gh[:, H4:] + b_hh_n))
        h = (1.0 - z) * n + z * h
        hs[t] = h
        # visit-level attention logit for this (flipped) step: (B, 1)
        alphas[t] = jnp.sum(h * w_vattn, axis=-1, keepdims=True) + b_vattn

    h_out_ref[...] = h

    # --- softmax over time of the visit-attention logits (register-resident) ---
    m = alphas[0]
    for t in range(1, T):
        m = jnp.maximum(m, alphas[t])
    exps = [jnp.exp(a - m) for a in alphas]
    denom = exps[0]
    for t in range(1, T):
        denom = denom + exps[t]
    inv_denom = pl.reciprocal(denom, approx=True)               # (B, 1), EUP slot

    # --- variable-level attention: one fused matmul over all flipped steps ---
    h_cat = jnp.concatenate(hs, axis=0)                         # (T*B, 2H), tile-aligned pieces
    beta_all = jnp.tanh(
        jnp.dot(h_cat.astype(jnp.bfloat16), w_battn_pad_ref[...],
                preferred_element_type=jnp.float32) + b_battn_ref[...])        # (TB, E)

    # --- context: c = sum_t (visit_w_t * beta_t * v_t) -> (B, E) ---
    c = jnp.zeros((B, E), jnp.float32)
    for t in range(T):
        w_t = exps[t] * inv_denom                               # (B, 1)
        c = c + w_t * beta_all[t * B:(t + 1) * B, :] * v_flat[t * B:(t + 1) * B, :]

    # --- output layer + exact softmax over classes (dim 1) ---
    logits = jnp.dot(c, w_out_t_ref[...],
                     preferred_element_type=jnp.float32) + b_out_ref[...]
    logits = logits - jnp.max(logits, axis=1, keepdims=True)
    e_l = jnp.exp(logits)
    out_ref[...] = e_l / jnp.sum(e_l, axis=1, keepdims=True)    # exact normalization


# ------------------------- one-time weight fusion -----------------------------


def prepare_fused_params(params):
    """Host-side weight fusion, run ONCE (not per forward call)."""
    E = params["w_emb"].shape[0]
    H = params["w_hh_vis"].shape[1]
    assert params["w_hh_var"].shape[1] == H, "fused recurrence needs Hvis == Hvar"

    wiv, wia = params["w_ih_vis"], params["w_ih_var"]          # (3H, E)
    whv, wha = params["w_hh_vis"], params["w_hh_var"]          # (3H, H)
    biv, bia = params["b_ih_vis"][0], params["b_ih_var"][0]    # (3H,)
    bhv, bha = params["b_hh_vis"][0], params["b_hh_var"][0]    # (3H,)

    # gate order: [r_vis, r_var, z_vis, z_var, n_vis, n_var]  (keep — v5e pop overlap)
    w_ih_cat = jnp.concatenate(
        [wiv[:H].T, wia[:H].T, wiv[H:2 * H].T, wia[H:2 * H].T,
         wiv[2 * H:].T, wia[2 * H:].T], axis=1)                # (E, 6H)
    b_ih_cat = jnp.concatenate(
        [biv[:H] + bhv[:H], bia[:H] + bha[:H],
         biv[H:2 * H] + bhv[H:2 * H], bia[H:2 * H] + bha[H:2 * H],
         biv[2 * H:], bia[2 * H:]])[None, :]                   # (1, 6H)

    zero = jnp.zeros((H, H), jnp.float32)
    top = jnp.concatenate(
        [whv[:H].T, zero, whv[H:2 * H].T, zero, whv[2 * H:].T, zero], axis=1)
    bot = jnp.concatenate(
        [zero, wha[:H].T, zero, wha[H:2 * H].T, zero, wha[2 * H:].T], axis=1)
    w_hh_cat = jnp.concatenate([top, bot], axis=0)             # (2H, 6H)
    b_hh_n = jnp.concatenate([bhv[2 * H:], bha[2 * H:]])[None, :]   # (1, 2H)

    w_vattn_pad = jnp.concatenate(
        [params["w_vattn"], jnp.zeros((1, H), jnp.float32)], axis=1)   # (1, 2H)
    w_battn_pad = jnp.concatenate(
        [jnp.zeros((H, E), jnp.float32), params["w_battn"].T], axis=0)  # (2H, E)

    fused = {
        "w_emb_t": params["w_emb"].T.astype(jnp.bfloat16),     # (N, E)
        "b_emb": params["b_emb"],
        "w_ih_cat": w_ih_cat.astype(jnp.bfloat16),
        "b_ih_cat": b_ih_cat,
        "w_hh_cat": w_hh_cat,                                  # f32 recurrence
        "b_hh_n": b_hh_n,
        "w_vattn_pad": w_vattn_pad,
        "b_vattn": params["b_vattn"],
        "w_battn_pad": w_battn_pad.astype(jnp.bfloat16),
        "b_battn": params["b_battn"],
        "w_out_t": params["w_out"].T,                          # (E, C)
        "b_out": params["b_out"],
    }
    return jax.tree_util.tree_map(jnp.asarray, fused)


# ------------------------------- wrapper -------------------------------------


@jax.jit
def retain_forward(x, hvar0, hvis0, fused):
    T, B, N = x.shape
    H2 = fused["w_hh_cat"].shape[0]
    H = H2 // 2
    num_class = fused["w_out_t"].shape[1]

    # Pad batch to a sublane tile (8) so every per-timestep slice is tile-aligned.
    Bp = ((B + 7) // 8) * 8
    h0 = jnp.concatenate([hvis0[0], hvar0[0]], axis=-1)        # (B, 2H)
    if Bp != B:
        x = jnp.pad(x, ((0, 0), (0, Bp - B), (0, 0)))
        h0 = jnp.pad(h0, ((0, Bp - B), (0, 0)))
    x_flat = x.reshape(T * Bp, N)                              # free HBM reshape

    vmem = pl.BlockSpec(memory_space=pltpu.MemorySpace.VMEM)
    args = (
        x_flat, h0,
        fused["w_emb_t"], fused["b_emb"],
        fused["w_ih_cat"], fused["b_ih_cat"], fused["w_hh_cat"], fused["b_hh_n"],
        fused["w_vattn_pad"], fused["b_vattn"],
        fused["w_battn_pad"], fused["b_battn"],
        fused["w_out_t"], fused["b_out"],
    )
    out, h_final = pl.pallas_call(
        retain_kernel,
        out_shape=(
            jax.ShapeDtypeStruct((Bp, num_class), jnp.float32),
            jax.ShapeDtypeStruct((Bp, H2), jnp.float32),
        ),
        in_specs=[vmem] * len(args),
        out_specs=(vmem, vmem),
    )(*args)

    out = out[:B]
    h_final = h_final[:B]
    hvis = h_final[:, :H][None]
    hvar = h_final[:, H:][None]
    return out, hvar, hvis


# ------------------------- pure-JAX reference --------------------------------


def _gru_ref(x_seq, h0, w_ih, w_hh, b_ih, b_hh):
    H = w_hh.shape[1]

    def step(h, x_t):
        gx = x_t @ w_ih.T + b_ih[0]
        gh = h @ w_hh.T + b_hh[0]
        r = jax.nn.sigmoid(gx[:, :H] + gh[:, :H])
        z = jax.nn.sigmoid(gx[:, H:2 * H] + gh[:, H:2 * H])
        n = jnp.tanh(gx[:, 2 * H:] + r * gh[:, 2 * H:])
        h_new = (1.0 - z) * n + z * h
        return h_new, h_new

    h_last, outs = lax.scan(step, h0, x_seq)
    return outs, h_last


def retain_reference(x, hvar0, hvis0, p):
    v = jnp.einsum("tbn,en->tbe", x, p["w_emb"]) + p["b_emb"]
    v_rev = jnp.flip(v, axis=0)
    vis_out, hvis = _gru_ref(v_rev, hvis0[0], p["w_ih_vis"], p["w_hh_vis"],
                             p["b_ih_vis"], p["b_hh_vis"])
    alpha = jnp.einsum("tbh,ah->tba", jnp.flip(vis_out, 0), p["w_vattn"]) + p["b_vattn"]
    visit_attn_w = jax.nn.softmax(alpha, axis=0)
    var_out, hvar = _gru_ref(v_rev, hvar0[0], p["w_ih_var"], p["w_hh_var"],
                             p["b_ih_var"], p["b_hh_var"])
    beta = jnp.einsum("tbh,eh->tbe", jnp.flip(var_out, 0), p["w_battn"]) + p["b_battn"]
    var_attn_w = jnp.tanh(beta)
    c = jnp.sum(visit_attn_w * var_attn_w * v, axis=0)
    out = jax.nn.softmax(c @ p["w_out"].T + p["b_out"], axis=1)
    return out, hvar[None], hvis[None]


# --------------------------------- main ---------------------------------------


def _init_params(key):
    # RetainNN sizes (small synthetic config)
    num_embeddings = 64
    embedding_dim = 32            # == var/visit GRU input size, == embedding_output_size
    Hvis = 32                     # visit_rnn_output_size
    Hvar = 32                     # var_rnn_output_size
    visit_attn_out = 1
    var_attn_out = embedding_dim
    num_class = 4

    def u(key, shape, scale=0.1):
        return jax.random.uniform(key, shape, jnp.float32, -scale, scale)

    ks = jax.random.split(key, 16)
    params = {
        "w_emb": u(ks[0], (embedding_dim, num_embeddings)),
        "b_emb": u(ks[1], (1, embedding_dim)),
        "w_ih_vis": u(ks[2], (3 * Hvis, embedding_dim)),
        "w_hh_vis": u(ks[3], (3 * Hvis, Hvis)),
        "b_ih_vis": u(ks[4], (1, 3 * Hvis)),
        "b_hh_vis": u(ks[5], (1, 3 * Hvis)),
        "w_ih_var": u(ks[6], (3 * Hvar, embedding_dim)),
        "w_hh_var": u(ks[7], (3 * Hvar, Hvar)),
        "b_ih_var": u(ks[8], (1, 3 * Hvar)),
        "b_hh_var": u(ks[9], (1, 3 * Hvar)),
        "w_vattn": u(ks[10], (visit_attn_out, Hvis)),
        "b_vattn": u(ks[11], (1, visit_attn_out)),
        "w_battn": u(ks[12], (var_attn_out, Hvar)),
        "b_battn": u(ks[13], (1, var_attn_out)),
        "w_out": u(ks[14], (num_class, embedding_dim)),
        "b_out": u(ks[15], (1, num_class)),
    }
    dims = dict(num_embeddings=num_embeddings, E=embedding_dim,
                Hvis=Hvis, Hvar=Hvar, num_class=num_class)
    return params, dims


if __name__ == "__main__":
    key = jax.random.PRNGKey(0)
    pkey, xkey = jax.random.split(key)
    params, dims = _init_params(pkey)

    # One-time weight fusion (cached pytree; NOT re-executed per forward call).
    fused = prepare_fused_params(params)

    T, B = 8, 2
    x = jax.random.normal(xkey, (T, B, dims["num_embeddings"]), jnp.float32)
    hvar0 = jnp.zeros((1, B, dims["Hvar"]), jnp.float32)
    hvis0 = jnp.zeros((1, B, dims["Hvis"]), jnp.float32)

    out, hvar, hvis = retain_forward(x, hvar0, hvis0, fused)
    jax.block_until_ready((out, hvar, hvis))

    out_ref, hvar_ref, hvis_ref = retain_reference(x, hvar0, hvis0, params)
    np.testing.assert_allclose(np.asarray(out), np.asarray(out_ref), rtol=1e-2, atol=1e-2)
    np.testing.assert_allclose(np.asarray(hvar), np.asarray(hvar_ref), rtol=1e-2, atol=1e-2)
    np.testing.assert_allclose(np.asarray(hvis), np.asarray(hvis_ref), rtol=1e-2, atol=1e-2)

    print("KERNEL_OK")
</pallas_src>

<mosaic_0001>
module attributes {stable_mosaic.version = 11 : i64} {
  func.func @retain_kernel(%arg0: memref<64x64xf32, #tpu.memory_space<vmem>>, %arg1: memref<8x64xf32, #tpu.memory_space<vmem>>, %arg2: memref<64x32xbf16, #tpu.memory_space<vmem>>, %arg3: memref<1x32xf32, #tpu.memory_space<vmem>>, %arg4: memref<32x192xbf16, #tpu.memory_space<vmem>>, %arg5: memref<1x192xf32, #tpu.memory_space<vmem>>, %arg6: memref<64x192xf32, #tpu.memory_space<vmem>>, %arg7: memref<1x64xf32, #tpu.memory_space<vmem>>, %arg8: memref<1x64xf32, #tpu.memory_space<vmem>>, %arg9: memref<1x1xf32, #tpu.memory_space<vmem>>, %arg10: memref<64x32xbf16, #tpu.memory_space<vmem>>, %arg11: memref<1x32xf32, #tpu.memory_space<vmem>>, %arg12: memref<32x4xf32, #tpu.memory_space<vmem>>, %arg13: memref<1x4xf32, #tpu.memory_space<vmem>>, %arg14: memref<8x4xf32, #tpu.memory_space<vmem>>, %arg15: memref<8x64xf32, #tpu.memory_space<vmem>>) attributes {dimension_semantics = [], scalar_prefetch = 0 : i64, scratch_operands = 0 : i64, tpu.core_type = #tpu.core_type<tc>} {
    %c0 = arith.constant 0 : index
    %c0_0 = arith.constant 0 : index
    %0 = vector.load %arg0[%c0, %c0_0] : memref<64x64xf32, #tpu.memory_space<vmem>>, vector<64x64xf32>
    %1 = arith.truncf %0 : vector<64x64xf32> to vector<64x64xbf16>
    %c0_1 = arith.constant 0 : index
    %c0_2 = arith.constant 0 : index
    %2 = vector.load %arg2[%c0_1, %c0_2] : memref<64x32xbf16, #tpu.memory_space<vmem>>, vector<64x32xbf16>
    %cst = arith.constant dense<0.000000e+00> : vector<64x32xf32>
    %3 = tpu.matmul %1, %2, %cst {dimension_numbers = #tpu.dot_dimension_numbers<[1], [0], [0], [1], [0, 0, 1, 1], [], []>} : vector<64x64xbf16>, vector<64x32xbf16>, vector<64x32xf32> -> vector<64x32xf32>
    %c0_3 = arith.constant 0 : index
    %c0_4 = arith.constant 0 : index
    %4 = vector.load %arg3[%c0_3, %c0_4] : memref<1x32xf32, #tpu.memory_space<vmem>>, vector<1x32xf32>
    %5 = vector.broadcast %4 : vector<1x32xf32> to vector<64x32xf32>
    %6 = arith.addf %3, %5 : vector<64x32xf32>
    %7 = arith.truncf %6 : vector<64x32xf32> to vector<64x32xbf16>
    %c0_5 = arith.constant 0 : index
    %c0_6 = arith.constant 0 : index
    %8 = vector.load %arg4[%c0_5, %c0_6] : memref<32x192xbf16, #tpu.memory_space<vmem>>, vector<32x192xbf16>
    %cst_7 = arith.constant dense<0.000000e+00> : vector<64x192xf32>
    %9 = tpu.matmul %7, %8, %cst_7 {dimension_numbers = #tpu.dot_dimension_numbers<[1], [0], [0], [1], [0, 0, 1, 1], [], []>} : vector<64x32xbf16>, vector<32x192xbf16>, vector<64x192xf32> -> vector<64x192xf32>
    %c0_8 = arith.constant 0 : index
    %c0_9 = arith.constant 0 : index
    %10 = vector.load %arg5[%c0_8, %c0_9] : memref<1x192xf32, #tpu.memory_space<vmem>>, vector<1x192xf32>
    %11 = vector.broadcast %10 : vector<1x192xf32> to vector<64x192xf32>
    %12 = arith.addf %9, %11 : vector<64x192xf32>
    %c0_10 = arith.constant 0 : index
    %c0_11 = arith.constant 0 : index
    %13 = vector.load %arg6[%c0_10, %c0_11] : memref<64x192xf32, #tpu.memory_space<vmem>>, vector<64x192xf32>
    %c0_12 = arith.constant 0 : index
    %c0_13 = arith.constant 0 : index
    %14 = vector.load %arg7[%c0_12, %c0_13] : memref<1x64xf32, #tpu.memory_space<vmem>>, vector<1x64xf32>
    %15 = vector.shape_cast %14 : vector<1x64xf32> to vector<1x64xf32>
    %16 = vector.broadcast %15 : vector<1x64xf32> to vector<8x64xf32>
    %c0_14 = arith.constant 0 : index
    %c0_15 = arith.constant 0 : index
    %17 = vector.load %arg8[%c0_14, %c0_15] : memref<1x64xf32, #tpu.memory_space<vmem>>, vector<1x64xf32>
    %c0_16 = arith.constant 0 : index
    %c0_17 = arith.constant 0 : index
    %18 = vector.load %arg9[%c0_16, %c0_17] : memref<1x1xf32, #tpu.memory_space<vmem>>, vector<1x1xf32>
    %c0_18 = arith.constant 0 : index
    %c0_19 = arith.constant 0 : index
    %19 = vector.load %arg1[%c0_18, %c0_19] : memref<8x64xf32, #tpu.memory_space<vmem>>, vector<8x64xf32>
    %20 = vector.extract_strided_slice %12 {offsets = [56, 0], sizes = [8, 192], strides = [1, 1]} : vector<64x192xf32> to vector<8x192xf32>
    %cst_20 = arith.constant dense<0.000000e+00> : vector<8x192xf32>
    %21 = tpu.matmul %19, %13, %cst_20 {dimension_numbers = #tpu.dot_dimension_numbers<[1], [0], [0], [1], [0, 0, 1, 1], [], []>} : vector<8x64xf32>, vector<64x192xf32>, vector<8x192xf32> -> vector<8x192xf32>
    %22 = vector.extract_strided_slice %20 {offsets = [0, 0], sizes = [8, 128], strides = [1, 1]} : vector<8x192xf32> to vector<8x128xf32>
    %23 = vector.extract_strided_slice %21 {offsets = [0, 0], sizes = [8, 128], strides = [1, 1]} : vector<8x192xf32> to vector<8x128xf32>
    %24 = arith.addf %22, %23 : vector<8x128xf32>
    %25 = arith.negf %24 : vector<8x128xf32>
    %26 = math.exp %25 : vector<8x128xf32>
    %cst_21 = arith.constant 1.000000e+00 : f32
    %27 = vector.broadcast %cst_21 : f32 to vector<8x128xf32>
    %28 = arith.addf %27, %26 : vector<8x128xf32>
    %29 = arith.divf %27, %28 : vector<8x128xf32>
    %30 = vector.extract_strided_slice %29 {offsets = [0, 0], sizes = [8, 64], strides = [1, 1]} : vector<8x128xf32> to vector<8x64xf32>
    %31 = vector.extract_strided_slice %29 {offsets = [0, 64], sizes = [8, 64], strides = [1, 1]} : vector<8x128xf32> to vector<8x64xf32>
    %32 = vector.extract_strided_slice %20 {offsets = [0, 128], sizes = [8, 64], strides = [1, 1]} : vector<8x192xf32> to vector<8x64xf32>
    %33 = vector.extract_strided_slice %21 {offsets = [0, 128], sizes = [8, 64], strides = [1, 1]} : vector<8x192xf32> to vector<8x64xf32>
    %34 = arith.addf %33, %16 : vector<8x64xf32>
    %35 = arith.mulf %30, %34 : vector<8x64xf32>
    %36 = arith.addf %32, %35 : vector<8x64xf32>
    %37 = math.tanh %36 : vector<8x64xf32>
    %cst_22 = arith.constant 1.000000e+00 : f32
    %38 = vector.broadcast %cst_22 : f32 to vector<8x64xf32>
    %39 = arith.subf %38, %31 : vector<8x64xf32>
    %40 = arith.mulf %39, %37 : vector<8x64xf32>
    %41 = arith.mulf %31, %19 : vector<8x64xf32>
    %42 = arith.addf %40, %41 : vector<8x64xf32>
    %43 = vector.broadcast %17 : vector<1x64xf32> to vector<8x64xf32>
    %44 = arith.mulf %42, %43 : vector<8x64xf32>
    %cst_23 = arith.constant dense<0.000000e+00> : vector<8xf32>
    %45 = vector.multi_reduction <add>, %44, %cst_23 [1] : vector<8x64xf32> to vector<8xf32>
    %46 = vector.shape_cast %45 : vector<8xf32> to vector<8x1xf32>
    %47 = vector.broadcast %18 : vector<1x1xf32> to vector<8x1xf32>
    %48 = arith.addf %46, %47 : vector<8x1xf32>
    %49 = vector.extract_strided_slice %12 {offsets = [48, 0], sizes = [8, 192], strides = [1, 1]} : vector<64x192xf32> to vector<8x192xf32>
    %cst_24 = arith.constant dense<0.000000e+00> : vector<8x192xf32>
    %50 = tpu.matmul %42, %13, %cst_24 {dimension_numbers = #tpu.dot_dimension_numbers<[1], [0], [0], [1], [0, 0, 1, 1], [], []>} : vector<8x64xf32>, vector<64x192xf32>, vector<8x192xf32> -> vector<8x192xf32>
    %51 = vector.extract_strided_slice %49 {offsets = [0, 0], sizes = [8, 128], strides = [1, 1]} : vector<8x192xf32> to vector<8x128xf32>
    %52 = vector.extract_strided_slice %50 {offsets = [0, 0], sizes = [8, 128], strides = [1, 1]} : vector<8x192xf32> to vector<8x128xf32>
    %53 = arith.addf %51, %52 : vector<8x128xf32>
    %54 = arith.negf %53 : vector<8x128xf32>
    %55 = math.exp %54 : vector<8x128xf32>
    %cst_25 = arith.constant 1.000000e+00 : f32
    %56 = vector.broadcast %cst_25 : f32 to vector<8x128xf32>
    %57 = arith.addf %56, %55 : vector<8x128xf32>
    %58 = arith.divf %56, %57 : vector<8x128xf32>
    %59 = vector.extract_strided_slice %58 {offsets = [0, 0], sizes = [8, 64], strides = [1, 1]} : vector<8x128xf32> to vector<8x64xf32>
    %60 = vector.extract_strided_slice %58 {offsets = [0, 64], sizes = [8, 64], strides = [1, 1]} : vector<8x128xf32> to vector<8x64xf32>
    %61 = vector.extract_strided_slice %49 {offsets = [0, 128], sizes = [8, 64], strides = [1, 1]} : vector<8x192xf32> to vector<8x64xf32>
    %62 = vector.extract_strided_slice %50 {offsets = [0, 128], sizes = [8, 64], strides = [1, 1]} : vector<8x192xf32> to vector<8x64xf32>
    %63 = arith.addf %62, %16 : vector<8x64xf32>
    %64 = arith.mulf %59, %63 : vector<8x64xf32>
    %65 = arith.addf %61, %64 : vector<8x64xf32>
    %66 = math.tanh %65 : vector<8x64xf32>
    %cst_26 = arith.constant 1.000000e+00 : f32
    %67 = vector.broadcast %cst_26 : f32 to vector<8x64xf32>
    %68 = arith.subf %67, %60 : vector<8x64xf32>
    %69 = arith.mulf %68, %66 : vector<8x64xf32>
    %70 = arith.mulf %60, %42 : vector<8x64xf32>
    %71 = arith.addf %69, %70 : vector<8x64xf32>
    %72 = vector.broadcast %17 : vector<1x64xf32> to vector<8x64xf32>
    %73 = arith.mulf %71, %72 : vector<8x64xf32>
    %cst_27 = arith.constant dense<0.000000e+00> : vector<8xf32>
    %74 = vector.multi_reduction <add>, %73, %cst_27 [1] : vector<8x64xf32> to vector<8xf32>
    %75 = vector.shape_cast %74 : vector<8xf32> to vector<8x1xf32>
    %76 = vector.broadcast %18 : vector<1x1xf32> to vector<8x1xf32>
    %77 = arith.addf %75, %76 : vector<8x1xf32>
    %78 = vector.extract_strided_slice %12 {offsets = [40, 0], sizes = [8, 192], strides = [1, 1]} : vector<64x192xf32> to vector<8x192xf32>
    %cst_28 = arith.constant dense<0.000000e+00> : vector<8x192xf32>
    %79 = tpu.matmul %71, %13, %cst_28 {dimension_numbers = #tpu.dot_dimension_numbers<[1], [0], [0], [1], [0, 0, 1, 1], [], []>} : vector<8x64xf32>, vector<64x192xf32>, vector<8x192xf32> -> vector<8x192xf32>
    %80 = vector.extract_strided_slice %78 {offsets = [0, 0], sizes = [8, 128], strides = [1, 1]} : vector<8x192xf32> to vector<8x128xf32>
    %81 = vector.extract_strided_slice %79 {offsets = [0, 0], sizes = [8, 128], strides = [1, 1]} : vector<8x192xf32> to vector<8x128xf32>
    %82 = arith.addf %80, %81 : vector<8x128xf32>
    %83 = arith.negf %82 : vector<8x128xf32>
    %84 = math.exp %83 : vector<8x128xf32>
    %cst_29 = arith.constant 1.000000e+00 : f32
    %85 = vector.broadcast %cst_29 : f32 to vector<8x128xf32>
    %86 = arith.addf %85, %84 : vector<8x128xf32>
    %87 = arith.divf %85, %86 : vector<8x128xf32>
    %88 = vector.extract_strided_slice %87 {offsets = [0, 0], sizes = [8, 64], strides = [1, 1]} : vector<8x128xf32> to vector<8x64xf32>
    %89 = vector.extract_strided_slice %87 {offsets = [0, 64], sizes = [8, 64], strides = [1, 1]} : vector<8x128xf32> to vector<8x64xf32>
    %90 = vector.extract_strided_slice %78 {offsets = [0, 128], sizes = [8, 64], strides = [1, 1]} : vector<8x192xf32> to vector<8x64xf32>
    %91 = vector.extract_strided_slice %79 {offsets = [0, 128], sizes = [8, 64], strides = [1, 1]} : vector<8x192xf32> to vector<8x64xf32>
    %92 = arith.addf %91, %16 : vector<8x64xf32>
    %93 = arith.mulf %88, %92 : vector<8x64xf32>
    %94 = arith.addf %90, %93 : vector<8x64xf32>
    %95 = math.tanh %94 : vector<8x64xf32>
    %cst_30 = arith.constant 1.000000e+00 : f32
    %96 = vector.broadcast %cst_30 : f32 to vector<8x64xf32>
    %97 = arith.subf %96, %89 : vector<8x64xf32>
    %98 = arith.mulf %97, %95 : vector<8x64xf32>
    %99 = arith.mulf %89, %71 : vector<8x64xf32>
    %100 = arith.addf %98, %99 : vector<8x64xf32>
    %101 = vector.broadcast %17 : vector<1x64xf32> to vector<8x64xf32>
    %102 = arith.mulf %100, %101 : vector<8x64xf32>
    %cst_31 = arith.constant dense<0.000000e+00> : vector<8xf32>
    %103 = vector.multi_reduction <add>, %102, %cst_31 [1] : vector<8x64xf32> to vector<8xf32>
    %104 = vector.shape_cast %103 : vector<8xf32> to vector<8x1xf32>
    %105 = vector.broadcast %18 : vector<1x1xf32> to vector<8x1xf32>
    %106 = arith.addf %104, %105 : vector<8x1xf32>
    %107 = vector.extract_strided_slice %12 {offsets = [32, 0], sizes = [8, 192], strides = [1, 1]} : vector<64x192xf32> to vector<8x192xf32>
    %cst_32 = arith.constant dense<0.000000e+00> : vector<8x192xf32>
    %108 = tpu.matmul %100, %13, %cst_32 {dimension_numbers = #tpu.dot_dimension_numbers<[1], [0], [0], [1], [0, 0, 1, 1], [], []>} : vector<8x64xf32>, vector<64x192xf32>, vector<8x192xf32> -> vector<8x192xf32>
    %109 = vector.extract_strided_slice %107 {offsets = [0, 0], sizes = [8, 128], strides = [1, 1]} : vector<8x192xf32> to vector<8x128xf32>
    %110 = vector.extract_strided_slice %108 {offsets = [0, 0], sizes = [8, 128], strides = [1, 1]} : vector<8x192xf32> to vector<8x128xf32>
    %111 = arith.addf %109, %110 : vector<8x128xf32>
    %112 = arith.negf %111 : vector<8x128xf32>
    %113 = math.exp %112 : vector<8x128xf32>
    %cst_33 = arith.constant 1.000000e+00 : f32
    %114 = vector.broadcast %cst_33 : f32 to vector<8x128xf32>
    %115 = arith.addf %114, %113 : vector<8x128xf32>
    %116 = arith.divf %114, %115 : vector<8x128xf32>
    %117 = vector.extract_strided_slice %116 {offsets = [0, 0], sizes = [8, 64], strides = [1, 1]} : vector<8x128xf32> to vector<8x64xf32>
    %118 = vector.extract_strided_slice %116 {offsets = [0, 64], sizes = [8, 64], strides = [1, 1]} : vector<8x128xf32> to vector<8x64xf32>
    %119 = vector.extract_strided_slice %107 {offsets = [0, 128], sizes = [8, 64], strides = [1, 1]} : vector<8x192xf32> to vector<8x64xf32>
    %120 = vector.extract_strided_slice %108 {offsets = [0, 128], sizes = [8, 64], strides = [1, 1]} : vector<8x192xf32> to vector<8x64xf32>
    %121 = arith.addf %120, %16 : vector<8x64xf32>
    %122 = arith.mulf %117, %121 : vector<8x64xf32>
    %123 = arith.addf %119, %122 : vector<8x64xf32>
    %124 = math.tanh %123 : vector<8x64xf32>
    %cst_34 = arith.constant 1.000000e+00 : f32
    %125 = vector.broadcast %cst_34 : f32 to vector<8x64xf32>
    %126 = arith.subf %125, %118 : vector<8x64xf32>
    %127 = arith.mulf %126, %124 : vector<8x64xf32>
    %128 = arith.mulf %118, %100 : vector<8x64xf32>
    %129 = arith.addf %127, %128 : vector<8x64xf32>
    %130 = vector.broadcast %17 : vector<1x64xf32> to vector<8x64xf32>
    %131 = arith.mulf %129, %130 : vector<8x64xf32>
    %cst_35 = arith.constant dense<0.000000e+00> : vector<8xf32>
    %132 = vector.multi_reduction <add>, %131, %cst_35 [1] : vector<8x64xf32> to vector<8xf32>
    %133 = vector.shape_cast %132 : vector<8xf32> to vector<8x1xf32>
    %134 = vector.broadcast %18 : vector<1x1xf32> to vector<8x1xf32>
    %135 = arith.addf %133, %134 : vector<8x1xf32>
    %136 = vector.extract_strided_slice %12 {offsets = [24, 0], sizes = [8, 192], strides = [1, 1]} : vector<64x192xf32> to vector<8x192xf32>
    %cst_36 = arith.constant dense<0.000000e+00> : vector<8x192xf32>
    %137 = tpu.matmul %129, %13, %cst_36 {dimension_numbers = #tpu.dot_dimension_numbers<[1], [0], [0], [1], [0, 0, 1, 1], [], []>} : vector<8x64xf32>, vector<64x192xf32>, vector<8x192xf32> -> vector<8x192xf32>
    %138 = vector.extract_strided_slice %136 {offsets = [0, 0], sizes = [8, 128], strides = [1, 1]} : vector<8x192xf32> to vector<8x128xf32>
    %139 = vector.extract_strided_slice %137 {offsets = [0, 0], sizes = [8, 128], strides = [1, 1]} : vector<8x192xf32> to vector<8x128xf32>
    %140 = arith.addf %138, %139 : vector<8x128xf32>
    %141 = arith.negf %140 : vector<8x128xf32>
    %142 = math.exp %141 : vector<8x128xf32>
    %cst_37 = arith.constant 1.000000e+00 : f32
    %143 = vector.broadcast %cst_37 : f32 to vector<8x128xf32>
    %144 = arith.addf %143, %142 : vector<8x128xf32>
    %145 = arith.divf %143, %144 : vector<8x128xf32>
    %146 = vector.extract_strided_slice %145 {offsets = [0, 0], sizes = [8, 64], strides = [1, 1]} : vector<8x128xf32> to vector<8x64xf32>
    %147 = vector.extract_strided_slice %145 {offsets = [0, 64], sizes = [8, 64], strides = [1, 1]} : vector<8x128xf32> to vector<8x64xf32>
    %148 = vector.extract_strided_slice %136 {offsets = [0, 128], sizes = [8, 64], strides = [1, 1]} : vector<8x192xf32> to vector<8x64xf32>
    %149 = vector.extract_strided_slice %137 {offsets = [0, 128], sizes = [8, 64], strides = [1, 1]} : vector<8x192xf32> to vector<8x64xf32>
    %150 = arith.addf %149, %16 : vector<8x64xf32>
    %151 = arith.mulf %146, %150 : vector<8x64xf32>
    %152 = arith.addf %148, %151 : vector<8x64xf32>
    %153 = math.tanh %152 : vector<8x64xf32>
    %cst_38 = arith.constant 1.000000e+00 : f32
    %154 = vector.broadcast %cst_38 : f32 to vector<8x64xf32>
    %155 = arith.subf %154, %147 : vector<8x64xf32>
    %156 = arith.mulf %155, %153 : vector<8x64xf32>
    %157 = arith.mulf %147, %129 : vector<8x64xf32>
    %158 = arith.addf %156, %157 : vector<8x64xf32>
    %159 = vector.broadcast %17 : vector<1x64xf32> to vector<8x64xf32>
    %160 = arith.mulf %158, %159 : vector<8x64xf32>
    %cst_39 = arith.constant dense<0.000000e+00> : vector<8xf32>
    %161 = vector.multi_reduction <add>, %160, %cst_39 [1] : vector<8x64xf32> to vector<8xf32>
    %162 = vector.shape_cast %161 : vector<8xf32> to vector<8x1xf32>
    %163 = vector.broadcast %18 : vector<1x1xf32> to vector<8x1xf32>
    %164 = arith.addf %162, %163 : vector<8x1xf32>
    %165 = vector.extract_strided_slice %12 {offsets = [16, 0], sizes = [8, 192], strides = [1, 1]} : vector<64x192xf32> to vector<8x192xf32>
    %cst_40 = arith.constant dense<0.000000e+00> : vector<8x192xf32>
    %166 = tpu.matmul %158, %13, %cst_40 {dimension_numbers = #tpu.dot_dimension_numbers<[1], [0], [0], [1], [0, 0, 1, 1], [], []>} : vector<8x64xf32>, vector<64x192xf32>, vector<8x192xf32> -> vector<8x192xf32>
    %167 = vector.extract_strided_slice %165 {offsets = [0, 0], sizes = [8, 128], strides = [1, 1]} : vector<8x192xf32> to vector<8x128xf32>
    %168 = vector.extract_strided_slice %166 {offsets = [0, 0], sizes = [8, 128], strides = [1, 1]} : vector<8x192xf32> to vector<8x128xf32>
    %169 = arith.addf %167, %168 : vector<8x128xf32>
    %170 = arith.negf %169 : vector<8x128xf32>
    %171 = math.exp %170 : vector<8x128xf32>
    %cst_41 = arith.constant 1.000000e+00 : f32
    %172 = vector.broadcast %cst_41 : f32 to vector<8x128xf32>
    %173 = arith.addf %172, %171 : vector<8x128xf32>
    %174 = arith.divf %172, %173 : vector<8x128xf32>
    %175 = vector.extract_strided_slice %174 {offsets = [0, 0], sizes = [8, 64], strides = [1, 1]} : vector<8x128xf32> to vector<8x64xf32>
    %176 = vector.extract_strided_slice %174 {offsets = [0, 64], sizes = [8, 64], strides = [1, 1]} : vector<8x128xf32> to vector<8x64xf32>
    %177 = vector.extract_strided_slice %165 {offsets = [0, 128], sizes = [8, 64], strides = [1, 1]} : vector<8x192xf32> to vector<8x64xf32>
    %178 = vector.extract_strided_slice %166 {offsets = [0, 128], sizes = [8, 64], strides = [1, 1]} : vector<8x192xf32> to vector<8x64xf32>
    %179 = arith.addf %178, %16 : vector<8x64xf32>
    %180 = arith.mulf %175, %179 : vector<8x64xf32>
    %181 = arith.addf %177, %180 : vector<8x64xf32>
    %182 = math.tanh %181 : vector<8x64xf32>
    %cst_42 = arith.constant 1.000000e+00 : f32
    %183 = vector.broadcast %cst_42 : f32 to vector<8x64xf32>
    %184 = arith.subf %183, %176 : vector<8x64xf32>
    %185 = arith.mulf %184, %182 : vector<8x64xf32>
    %186 = arith.mulf %176, %158 : vector<8x64xf32>
    %187 = arith.addf %185, %186 : vector<8x64xf32>
    %188 = vector.broadcast %17 : vector<1x64xf32> to vector<8x64xf32>
    %189 = arith.mulf %187, %188 : vector<8x64xf32>
    %cst_43 = arith.constant dense<0.000000e+00> : vector<8xf32>
    %190 = vector.multi_reduction <add>, %189, %cst_43 [1] : vector<8x64xf32> to vector<8xf32>
    %191 = vector.shape_cast %190 : vector<8xf32> to vector<8x1xf32>
    %192 = vector.broadcast %18 : vector<1x1xf32> to vector<8x1xf32>
    %193 = arith.addf %191, %192 : vector<8x1xf32>
    %194 = vector.extract_strided_slice %12 {offsets = [8, 0], sizes = [8, 192], strides = [1, 1]} : vector<64x192xf32> to vector<8x192xf32>
    %cst_44 = arith.constant dense<0.000000e+00> : vector<8x192xf32>
    %195 = tpu.matmul %187, %13, %cst_44 {dimension_numbers = #tpu.dot_dimension_numbers<[1], [0], [0], [1], [0, 0, 1, 1], [], []>} : vector<8x64xf32>, vector<64x192xf32>, vector<8x192xf32> -> vector<8x192xf32>
    %196 = vector.extract_strided_slice %194 {offsets = [0, 0], sizes = [8, 128], strides = [1, 1]} : vector<8x192xf32> to vector<8x128xf32>
    %197 = vector.extract_strided_slice %195 {offsets = [0, 0], sizes = [8, 128], strides = [1, 1]} : vector<8x192xf32> to vector<8x128xf32>
    %198 = arith.addf %196, %197 : vector<8x128xf32>
    %199 = arith.negf %198 : vector<8x128xf32>
    %200 = math.exp %199 : vector<8x128xf32>
    %cst_45 = arith.constant 1.000000e+00 : f32
    %201 = vector.broadcast %cst_45 : f32 to vector<8x128xf32>
    %202 = arith.addf %201, %200 : vector<8x128xf32>
    %203 = arith.divf %201, %202 : vector<8x128xf32>
    %204 = vector.extract_strided_slice %203 {offsets = [0, 0], sizes = [8, 64], strides = [1, 1]} : vector<8x128xf32> to vector<8x64xf32>
    %205 = vector.extract_strided_slice %203 {offsets = [0, 64], sizes = [8, 64], strides = [1, 1]} : vector<8x128xf32> to vector<8x64xf32>
    %206 = vector.extract_strided_slice %194 {offsets = [0, 128], sizes = [8, 64], strides = [1, 1]} : vector<8x192xf32> to vector<8x64xf32>
    %207 = vector.extract_strided_slice %195 {offsets = [0, 128], sizes = [8, 64], strides = [1, 1]} : vector<8x192xf32> to vector<8x64xf32>
    %208 = arith.addf %207, %16 : vector<8x64xf32>
    %209 = arith.mulf %204, %208 : vector<8x64xf32>
    %210 = arith.addf %206, %209 : vector<8x64xf32>
    %211 = math.tanh %210 : vector<8x64xf32>
    %cst_46 = arith.constant 1.000000e+00 : f32
    %212 = vector.broadcast %cst_46 : f32 to vector<8x64xf32>
    %213 = arith.subf %212, %205 : vector<8x64xf32>
    %214 = arith.mulf %213, %211 : vector<8x64xf32>
    %215 = arith.mulf %205, %187 : vector<8x64xf32>
    %216 = arith.addf %214, %215 : vector<8x64xf32>
    %217 = vector.broadcast %17 : vector<1x64xf32> to vector<8x64xf32>
    %218 = arith.mulf %216, %217 : vector<8x64xf32>
    %cst_47 = arith.constant dense<0.000000e+00> : vector<8xf32>
    %219 = vector.multi_reduction <add>, %218, %cst_47 [1] : vector<8x64xf32> to vector<8xf32>
    %220 = vector.shape_cast %219 : vector<8xf32> to vector<8x1xf32>
    %221 = vector.broadcast %18 : vector<1x1xf32> to vector<8x1xf32>
    %222 = arith.addf %220, %221 : vector<8x1xf32>
    %223 = vector.extract_strided_slice %12 {offsets = [0, 0], sizes = [8, 192], strides = [1, 1]} : vector<64x192xf32> to vector<8x192xf32>
    %cst_48 = arith.constant dense<0.000000e+00> : vector<8x192xf32>
    %224 = tpu.matmul %216, %13, %cst_48 {dimension_numbers = #tpu.dot_dimension_numbers<[1], [0], [0], [1], [0, 0, 1, 1], [], []>} : vector<8x64xf32>, vector<64x192xf32>, vector<8x192xf32> -> vector<8x192xf32>
    %225 = vector.extract_strided_slice %223 {offsets = [0, 0], sizes = [8, 128], strides = [1, 1]} : vector<8x192xf32> to vector<8x128xf32>
    %226 = vector.extract_strided_slice %224 {offsets = [0, 0], sizes = [8, 128], strides = [1, 1]} : vector<8x192xf32> to vector<8x128xf32>
    %227 = arith.addf %225, %226 : vector<8x128xf32>
    %228 = arith.negf %227 : vector<8x128xf32>
    %229 = math.exp %228 : vector<8x128xf32>
    %cst_49 = arith.constant 1.000000e+00 : f32
    %230 = vector.broadcast %cst_49 : f32 to vector<8x128xf32>
    %231 = arith.addf %230, %229 : vector<8x128xf32>
    %232 = arith.divf %230, %231 : vector<8x128xf32>
    %233 = vector.extract_strided_slice %232 {offsets = [0, 0], sizes = [8, 64], strides = [1, 1]} : vector<8x128xf32> to vector<8x64xf32>
    %234 = vector.extract_strided_slice %232 {offsets = [0, 64], sizes = [8, 64], strides = [1, 1]} : vector<8x128xf32> to vector<8x64xf32>
    %235 = vector.extract_strided_slice %223 {offsets = [0, 128], sizes = [8, 64], strides = [1, 1]} : vector<8x192xf32> to vector<8x64xf32>
    %236 = vector.extract_strided_slice %224 {offsets = [0, 128], sizes = [8, 64], strides = [1, 1]} : vector<8x192xf32> to vector<8x64xf32>
    %237 = arith.addf %236, %16 : vector<8x64xf32>
    %238 = arith.mulf %233, %237 : vector<8x64xf32>
    %239 = arith.addf %235, %238 : vector<8x64xf32>
    %240 = math.tanh %239 : vector<8x64xf32>
    %cst_50 = arith.constant 1.000000e+00 : f32
    %241 = vector.broadcast %cst_50 : f32 to vector<8x64xf32>
    %242 = arith.subf %241, %234 : vector<8x64xf32>
    %243 = arith.mulf %242, %240 : vector<8x64xf32>
    %244 = arith.mulf %234, %216 : vector<8x64xf32>
    %245 = arith.addf %243, %244 : vector<8x64xf32>
    %246 = vector.broadcast %17 : vector<1x64xf32> to vector<8x64xf32>
    %247 = arith.mulf %245, %246 : vector<8x64xf32>
    %cst_51 = arith.constant dense<0.000000e+00> : vector<8xf32>
    %248 = vector.multi_reduction <add>, %247, %cst_51 [1] : vector<8x64xf32> to vector<8xf32>
    %249 = vector.shape_cast %248 : vector<8xf32> to vector<8x1xf32>
    %250 = vector.broadcast %18 : vector<1x1xf32> to vector<8x1xf32>
    %251 = arith.addf %249, %250 : vector<8x1xf32>
    %c0_52 = arith.constant 0 : index
    %c0_53 = arith.constant 0 : index
    %252 = vector.load %arg15[%c0_52, %c0_53] : memref<8x64xf32, #tpu.memory_space<vmem>>, vector<8x64xf32>
    tpu.vector_store %arg15[%c0_52, %c0_53], %245 {strides = array<i32>} : memref<8x64xf32, #tpu.memory_space<vmem>>, vector<8x64xf32>,
    %253 = arith.maximumf %251, %222 : vector<8x1xf32>
    %254 = arith.maximumf %253, %193 : vector<8x1xf32>
    %255 = arith.maximumf %254, %164 : vector<8x1xf32>
    %256 = arith.maximumf %255, %135 : vector<8x1xf32>
    %257 = arith.maximumf %256, %106 : vector<8x1xf32>
    %258 = arith.maximumf %257, %77 : vector<8x1xf32>
    %259 = arith.maximumf %258, %48 : vector<8x1xf32>
    %260 = arith.subf %251, %259 : vector<8x1xf32>
    %261 = math.exp %260 : vector<8x1xf32>
    %262 = arith.subf %222, %259 : vector<8x1xf32>
    %263 = math.exp %262 : vector<8x1xf32>
    %264 = arith.subf %193, %259 : vector<8x1xf32>
    %265 = math.exp %264 : vector<8x1xf32>
    %266 = arith.subf %164, %259 : vector<8x1xf32>
    %267 = math.exp %266 : vector<8x1xf32>
    %268 = arith.subf %135, %259 : vector<8x1xf32>
    %269 = math.exp %268 : vector<8x1xf32>
    %270 = arith.subf %106, %259 : vector<8x1xf32>
    %271 = math.exp %270 : vector<8x1xf32>
    %272 = arith.subf %77, %259 : vector<8x1xf32>
    %273 = math.exp %272 : vector<8x1xf32>
    %274 = arith.subf %48, %259 : vector<8x1xf32>
    %275 = math.exp %274 : vector<8x1xf32>
    %276 = arith.addf %261, %263 : vector<8x1xf32>
    %277 = arith.addf %276, %265 : vector<8x1xf32>
    %278 = arith.addf %277, %267 : vector<8x1xf32>
    %279 = arith.addf %278, %269 : vector<8x1xf32>
    %280 = arith.addf %279, %271 : vector<8x1xf32>
    %281 = arith.addf %280, %273 : vector<8x1xf32>
    %282 = arith.addf %281, %275 : vector<8x1xf32>
    %283 = tpu.reciprocal %282 {approx = true} : vector<8x1xf32> -> vector<8x1xf32>
    %284 = tpu.concatenate %245, %216, %187, %158, %129, %100, %71, %42 in 0 : vector<8x64xf32>, vector<8x64xf32>, vector<8x64xf32>, vector<8x64xf32>, vector<8x64xf32>, vector<8x64xf32>, vector<8x64xf32>, vector<8x64xf32> -> vector<64x64xf32>
    %285 = arith.truncf %284 : vector<64x64xf32> to vector<64x64xbf16>
    %c0_54 = arith.constant 0 : index
    %c0_55 = arith.constant 0 : index
    %286 = vector.load %arg10[%c0_54, %c0_55] : memref<64x32xbf16, #tpu.memory_space<vmem>>, vector<64x32xbf16>
    %cst_56 = arith.constant dense<0.000000e+00> : vector<64x32xf32>
    %287 = tpu.matmul %285, %286, %cst_56 {dimension_numbers = #tpu.dot_dimension_numbers<[1], [0], [0], [1], [0, 0, 1, 1], [], []>} : vector<64x64xbf16>, vector<64x32xbf16>, vector<64x32xf32> -> vector<64x32xf32>
    %c0_57 = arith.constant 0 : index
    %c0_58 = arith.constant 0 : index
    %288 = vector.load %arg11[%c0_57, %c0_58] : memref<1x32xf32, #tpu.memory_space<vmem>>, vector<1x32xf32>
    %289 = vector.broadcast %288 : vector<1x32xf32> to vector<64x32xf32>
    %290 = arith.addf %287, %289 : vector<64x32xf32>
    %291 = math.tanh %290 : vector<64x32xf32>
    %cst_59 = arith.constant 0.000000e+00 : f32
    %292 = vector.broadcast %cst_59 : f32 to vector<8x32xf32>
    %293 = arith.mulf %261, %283 : vector<8x1xf32>
    %294 = vector.extract_strided_slice %291 {offsets = [0, 0], sizes = [8, 32], strides = [1, 1]} : vector<64x32xf32> to vector<8x32xf32>
    %295 = vector.broadcast %293 : vector<8x1xf32> to vector<8x32xf32>
    %296 = arith.mulf %295, %294 : vector<8x32xf32>
    %297 = vector.extract_strided_slice %6 {offsets = [0, 0], sizes = [8, 32], strides = [1, 1]} : vector<64x32xf32> to vector<8x32xf32>
    %298 = arith.mulf %296, %297 : vector<8x32xf32>
    %299 = arith.addf %292, %298 : vector<8x32xf32>
    %300 = arith.mulf %263, %283 : vector<8x1xf32>
    %301 = vector.extract_strided_slice %291 {offsets = [8, 0], sizes = [8, 32], strides = [1, 1]} : vector<64x32xf32> to vector<8x32xf32>
    %302 = vector.broadcast %300 : vector<8x1xf32> to vector<8x32xf32>
    %303 = arith.mulf %302, %301 : vector<8x32xf32>
    %304 = vector.extract_strided_slice %6 {offsets = [8, 0], sizes = [8, 32], strides = [1, 1]} : vector<64x32xf32> to vector<8x32xf32>
    %305 = arith.mulf %303, %304 : vector<8x32xf32>
    %306 = arith.addf %299, %305 : vector<8x32xf32>
    %307 = arith.mulf %265, %283 : vector<8x1xf32>
    %308 = vector.extract_strided_slice %291 {offsets = [16, 0], sizes = [8, 32], strides = [1, 1]} : vector<64x32xf32> to vector<8x32xf32>
    %309 = vector.broadcast %307 : vector<8x1xf32> to vector<8x32xf32>
    %310 = arith.mulf %309, %308 : vector<8x32xf32>
    %311 = vector.extract_strided_slice %6 {offsets = [16, 0], sizes = [8, 32], strides = [1, 1]} : vector<64x32xf32> to vector<8x32xf32>
    %312 = arith.mulf %310, %311 : vector<8x32xf32>
    %313 = arith.addf %306, %312 : vector<8x32xf32>
    %314 = arith.mulf %267, %283 : vector<8x1xf32>
    %315 = vector.extract_strided_slice %291 {offsets = [24, 0], sizes = [8, 32], strides = [1, 1]} : vector<64x32xf32> to vector<8x32xf32>
    %316 = vector.broadcast %314 : vector<8x1xf32> to vector<8x32xf32>
    %317 = arith.mulf %316, %315 : vector<8x32xf32>
    %318 = vector.extract_strided_slice %6 {offsets = [24, 0], sizes = [8, 32], strides = [1, 1]} : vector<64x32xf32> to vector<8x32xf32>
    %319 = arith.mulf %317, %318 : vector<8x32xf32>
    %320 = arith.addf %313, %319 : vector<8x32xf32>
    %321 = arith.mulf %269, %283 : vector<8x1xf32>
    %322 = vector.extract_strided_slice %291 {offsets = [32, 0], sizes = [8, 32], strides = [1, 1]} : vector<64x32xf32> to vector<8x32xf32>
    %323 = vector.broadcast %321 : vector<8x1xf32> to vector<8x32xf32>
    %324 = arith.mulf %323, %322 : vector<8x32xf32>
    %325 = vector.extract_strided_slice %6 {offsets = [32, 0], sizes = [8, 32], strides = [1, 1]} : vector<64x32xf32> to vector<8x32xf32>
    %326 = arith.mulf %324, %325 : vector<8x32xf32>
    %327 = arith.addf %320, %326 : vector<8x32xf32>
    %328 = arith.mulf %271, %283 : vector<8x1xf32>
    %329 = vector.extract_strided_slice %291 {offsets = [40, 0], sizes = [8, 32], strides = [1, 1]} : vector<64x32xf32> to vector<8x32xf32>
    %330 = vector.broadcast %328 : vector<8x1xf32> to vector<8x32xf32>
    %331 = arith.mulf %330, %329 : vector<8x32xf32>
    %332 = vector.extract_strided_slice %6 {offsets = [40, 0], sizes = [8, 32], strides = [1, 1]} : vector<64x32xf32> to vector<8x32xf32>
    %333 = arith.mulf %331, %332 : vector<8x32xf32>
    %334 = arith.addf %327, %333 : vector<8x32xf32>
    %335 = arith.mulf %273, %283 : vector<8x1xf32>
    %336 = vector.extract_strided_slice %291 {offsets = [48, 0], sizes = [8, 32], strides = [1, 1]} : vector<64x32xf32> to vector<8x32xf32>
    %337 = vector.broadcast %335 : vector<8x1xf32> to vector<8x32xf32>
    %338 = arith.mulf %337, %336 : vector<8x32xf32>
    %339 = vector.extract_strided_slice %6 {offsets = [48, 0], sizes = [8, 32], strides = [1, 1]} : vector<64x32xf32> to vector<8x32xf32>
    %340 = arith.mulf %338, %339 : vector<8x32xf32>
    %341 = arith.addf %334, %340 : vector<8x32xf32>
    %342 = arith.mulf %275, %283 : vector<8x1xf32>
    %343 = vector.extract_strided_slice %291 {offsets = [56, 0], sizes = [8, 32], strides = [1, 1]} : vector<64x32xf32> to vector<8x32xf32>
    %344 = vector.broadcast %342 : vector<8x1xf32> to vector<8x32xf32>
    %345 = arith.mulf %344, %343 : vector<8x32xf32>
    %346 = vector.extract_strided_slice %6 {offsets = [56, 0], sizes = [8, 32], strides = [1, 1]} : vector<64x32xf32> to vector<8x32xf32>
    %347 = arith.mulf %345, %346 : vector<8x32xf32>
    %348 = arith.addf %341, %347 : vector<8x32xf32>
    %c0_60 = arith.constant 0 : index
    %c0_61 = arith.constant 0 : index
    %349 = vector.load %arg12[%c0_60, %c0_61] : memref<32x4xf32, #tpu.memory_space<vmem>>, vector<32x4xf32>
    %cst_62 = arith.constant dense<0.000000e+00> : vector<8x4xf32>
    %350 = tpu.matmul %348, %349, %cst_62 {dimension_numbers = #tpu.dot_dimension_numbers<[1], [0], [0], [1], [0, 0, 1, 1], [], []>} : vector<8x32xf32>, vector<32x4xf32>, vector<8x4xf32> -> vector<8x4xf32>
    %c0_63 = arith.constant 0 : index
    %c0_64 = arith.constant 0 : index
    %351 = vector.load %arg13[%c0_63, %c0_64] : memref<1x4xf32, #tpu.memory_space<vmem>>, vector<1x4xf32>
    %352 = vector.broadcast %351 : vector<1x4xf32> to vector<8x4xf32>
    %353 = arith.addf %350, %352 : vector<8x4xf32>
    %cst_65 = arith.constant dense<0xFF800000> : vector<8xf32>
    %354 = vector.multi_reduction <maximumf>, %353, %cst_65 [1] : vector<8x4xf32> to vector<8xf32>
    %355 = vector.shape_cast %354 : vector<8xf32> to vector<8x1xf32>
    %356 = vector.broadcast %355 : vector<8x1xf32> to vector<8x4xf32>
    %357 = arith.subf %353, %356 : vector<8x4xf32>
    %358 = math.exp %357 : vector<8x4xf32>
    %cst_66 = arith.constant dense<0.000000e+00> : vector<8xf32>
    %359 = vector.multi_reduction <add>, %358, %cst_66 [1] : vector<8x4xf32> to vector<8xf32>
    %360 = vector.shape_cast %359 : vector<8xf32> to vector<8x1xf32>
    %361 = vector.broadcast %360 : vector<8x1xf32> to vector<8x4xf32>
    %362 = arith.divf %358, %361 : vector<8x4xf32>
    %c0_67 = arith.constant 0 : index
    %c0_68 = arith.constant 0 : index
    %363 = vector.load %arg14[%c0_67, %c0_68] : memref<8x4xf32, #tpu.memory_space<vmem>>, vector<8x4xf32>
    tpu.vector_store %arg14[%c0_67, %c0_68], %362 {strides = array<i32>} : memref<8x4xf32, #tpu.memory_space<vmem>>, vector<8x4xf32>,
    return
  }
}

</mosaic_0001>

<llo_original>
// kernel: retain_forward.1
$region0: #{retain_forward.1}
  #allocation0 [shape = 'u32[]', space=smem, size = 0x4, offset = 0x4, fixed_abs, tag = 'smem constant byte address 0x4 - core index']
  #allocation1 [shape = 'u32[144,128]{1,0:T(1,128)}', space=vmem, size = 0x12000, scoped, tag = 'internal scratch']
  #allocation2 [shape = 'f32[1,1]{1,0:T(1,128)S(1)}', space=vmem, size = 0x200, scoped, tag = 'scoped memory for retain_forward.1']
  %s0 = inlined_call_operand.vmem [shape: f32[64,64], index: 0, kind: input, shape index: {}]
  %s1 = inlined_call_operand.vmem [shape: f32[8,64], index: 1, kind: input, shape index: {}]
  %s2 = inlined_call_operand.vmem [shape: bf16[64,32], index: 2, kind: input, shape index: {}]
  %s3 = inlined_call_operand.vmem [shape: f32[1,32], index: 3, kind: input, shape index: {}]
  %s4 = inlined_call_operand.vmem [shape: bf16[32,192], index: 4, kind: input, shape index: {}]
  %s5 = inlined_call_operand.vmem [shape: f32[1,192], index: 5, kind: input, shape index: {}]
  %s6 = inlined_call_operand.vmem [shape: f32[64,192], index: 6, kind: input, shape index: {}]
  %s7 = inlined_call_operand.vmem [shape: f32[1,64], index: 7, kind: input, shape index: {}]
  %s8 = inlined_call_operand.vmem [shape: f32[1,64], index: 8, kind: input, shape index: {}]
  %s9 = inlined_call_operand.<no memory space> [shape: f32[1,1], index: 9, kind: input, shape index: {}]
  %s10 = inlined_call_operand.vmem [shape: bf16[64,32], index: 10, kind: input, shape index: {}]
  %s11 = inlined_call_operand.vmem [shape: f32[1,32], index: 11, kind: input, shape index: {}]
  %s12 = inlined_call_operand.vmem [shape: f32[32,4], index: 12, kind: input, shape index: {}]
  %s13 = inlined_call_operand.vmem [shape: f32[1,4], index: 13, kind: input, shape index: {}]
  %s14 = inlined_call_operand.vmem [shape: f32[8,4], index: 14, kind: output, shape index: {0}]
  %s15 = inlined_call_operand.vmem [shape: f32[8,64], index: 15, kind: output, shape index: {1}]
  %16 = xla_tuple %s14, %s15
  %s17 = sld [smem:[#allocation0]]
  $region74: #{retain_forward.1} parent=0
    _
  %s19 = ssub.s32 1, %s17
  %s20 = scalar_select 0, %s19, %s17
  %v21 = vstv %s9
  %22 = vst [vmem:[#allocation2] sm:$0x1] %v21
  // Predicated region
  $region2: #{retain_forward.1} parent=0 // pred_check
    _
  $region3: #{retain_forward.1} parent=0 // pred_check_branch
    %24 = sbr.rel (0) target = $region5
  $region4: #{retain_forward.1} parent=0 // pred_region
    _
  $region5: #{retain_forward.1} parent=0 // pred_fallthru
    _
  // Predicated region
  $region6: #{retain_forward.1} parent=0 // pred_check
    _
  $region7: #{retain_forward.1} parent=0 // pred_check_branch
    %26 = sbr.rel (0) target = $region9
  $region8: #{retain_forward.1} parent=0 // pred_region
    _
  $region9: #{retain_forward.1} parent=0 // pred_fallthru
    _
  // Predicated region
  $region10: #{retain_forward.1} parent=0 // pred_check
    _
  $region11: #{retain_forward.1} parent=0 // pred_check_branch
    %28 = sbr.rel (0) target = $region13
  $region12: #{retain_forward.1} parent=0 // pred_region
    _
  $region13: #{retain_forward.1} parent=0 // pred_fallthru
    _
  // Predicated region
  $region14: #{retain_forward.1} parent=0 // pred_check
    _
  $region15: #{retain_forward.1} parent=0 // pred_check_branch
    %30 = sbr.rel (0) target = $region17
  $region16: #{retain_forward.1} parent=0 // pred_region
    _
  $region17: #{retain_forward.1} parent=0 // pred_fallthru
    _
  // Predicated region
  $region18: #{retain_forward.1} parent=0 // pred_check
    _
  $region19: #{retain_forward.1} parent=0 // pred_check_branch
    %32 = sbr.rel (0) target = $region21
  $region20: #{retain_forward.1} parent=0 // pred_region
    _
  $region21: #{retain_forward.1} parent=0 // pred_fallthru
    _
  // Predicated region
  $region22: #{retain_forward.1} parent=0 // pred_check
    _
  $region23: #{retain_forward.1} parent=0 // pred_check_branch
    %34 = sbr.rel (0) target = $region25
  $region24: #{retain_forward.1} parent=0 // pred_region
    _
  $region25: #{retain_forward.1} parent=0 // pred_fallthru
    _
  // Predicated region
  $region26: #{retain_forward.1} parent=0 // pred_check
    _
  $region27: #{retain_forward.1} parent=0 // pred_check_branch
    %36 = sbr.rel (0) target = $region29
  $region28: #{retain_forward.1} parent=0 // pred_region
    _
  $region29: #{retain_forward.1} parent=0 // pred_fallthru
    _
  // Predicated region
  $region30: #{retain_forward.1} parent=0 // pred_check
    _
  $region31: #{retain_forward.1} parent=0 // pred_check_branch
    %38 = sbr.rel (0) target = $region33
  $region32: #{retain_forward.1} parent=0 // pred_region
    _
  $region33: #{retain_forward.1} parent=0 // pred_fallthru
    _
  // Predicated region
  $region34: #{retain_forward.1} parent=0 // pred_check
    _
  $region35: #{retain_forward.1} parent=0 // pred_check_branch
    %40 = sbr.rel (0) target = $region37
  $region36: #{retain_forward.1} parent=0 // pred_region
    _
  $region37: #{retain_forward.1} parent=0 // pred_fallthru
    _
  // Predicated region
  $region38: #{retain_forward.1} parent=0 // pred_check
    _
  $region39: #{retain_forward.1} parent=0 // pred_check_branch
    %42 = sbr.rel (0) target = $region41
  $region40: #{retain_forward.1} parent=0 // pred_region
    _
  $region41: #{retain_forward.1} parent=0 // pred_fallthru
    _
  // Predicated region
  $region42: #{retain_forward.1} parent=0 // pred_check
    _
  $region43: #{retain_forward.1} parent=0 // pred_check_branch
    %44 = sbr.rel (0) target = $region45
  $region44: #{retain_forward.1} parent=0 // pred_region
    _
  $region45: #{retain_forward.1} parent=0 // pred_fallthru
    _
  // Predicated region
  $region46: #{retain_forward.1} parent=0 // pred_check
    _
  $region47: #{retain_forward.1} parent=0 // pred_check_branch
    %46 = sbr.rel (0) target = $region49
  $region48: #{retain_forward.1} parent=0 // pred_region
    _
  $region49: #{retain_forward.1} parent=0 // pred_fallthru
    _
  // Predicated region
  $region50: #{retain_forward.1} parent=0 // pred_check
    _
  $region51: #{retain_forward.1} parent=0 // pred_check_branch
    %48 = sbr.rel (0) target = $region53
  $region52: #{retain_forward.1} parent=0 // pred_region
    _
  $region53: #{retain_forward.1} parent=0 // pred_fallthru
    _
  // Predicated region
  $region54: #{retain_forward.1} parent=0 // pred_check
    _
  $region55: #{retain_forward.1} parent=0 // pred_check_branch
    %50 = sbr.rel (0) target = $region57
  $region56: #{retain_forward.1} parent=0 // pred_region
    _
  $region57: #{retain_forward.1} parent=0 // pred_fallthru
    _
  %v52 = vld [vmem:[%s0] sm:$0xff]
  %v53 = vld [vmem:[%s0 + $0x8] sm:$0xff]
  %v54 = vld [vmem:[%s0 + $0x10] sm:$0xff]
  %v55 = vld [vmem:[%s0 + $0x18] sm:$0xff]
  %v56 = vld [vmem:[%s0 + $0x20] sm:$0xff]
  %v57 = vld [vmem:[%s0 + $0x28] sm:$0xff]
  %v58 = vld [vmem:[%s0 + $0x30] sm:$0xff]
  %v59 = vld [vmem:[%s0 + $0x38] sm:$0xff]
  %v60 = vpack.c.bf16 %v53, %v52
  %v61 = vpack.c.bf16 %v55, %v54
  %v62 = vpack.c.bf16 %v57, %v56
  %v63 = vpack.c.bf16 %v59, %v58
  %v64 = vld [vmem:[%s2] sm:$0xf]
  %v65 = vld [vmem:[%s2 + $0x4] sm:$0xf]
  %v66 = vld [vmem:[%s2 + $0x8] sm:$0xf]
  %v67 = vld [vmem:[%s2 + $0xc] sm:$0xf]
  %v68 = vld [vmem:[%s2 + $0x10] sm:$0xf]
  %v69 = vld [vmem:[%s2 + $0x14] sm:$0xf]
  %v70 = vld [vmem:[%s2 + $0x18] sm:$0xf]
  %v71 = vld [vmem:[%s2 + $0x1c] sm:$0xf]
  %v72 = vld [vmem:[%s3] sm:$0x1]
  %v74 = vlaneseq
  %v75 = vshrl.u32 %v74, 7
  %v76 = vsub.s32 0, %v75
  %v77 = vrot.slane %v72, %v76
  %v87 = vunpack.c.l.b16 %v64
  %v88 = vunpack.c.l.b16 %v65
  %v89 = vunpack.c.l.b16 %v66
  %v90 = vunpack.c.l.b16 %v67
  %v91 = vunpack.c.l.b16 %v68
  %v92 = vunpack.c.l.b16 %v69
  %v93 = vunpack.c.l.b16 %v70
  %v94 = vunpack.c.l.b16 %v71
  %v95 = vpack.c.b16 %v88, %v87
  %v96 = vpack.c.b16 %v90, %v89
  %v97 = vpack.c.b16 %v92, %v91
  %v98 = vpack.c.b16 %v94, %v93
  %vm103 = vcmask 523264
  %v105 = vsel %vm103, %v60, 0
  %v108 = vsel %vm103, %v61, 0
  %v111 = vsel %vm103, %v62, 0
  %v114 = vsel %vm103, %v63, 0
  %116 = vmatprep.subr.bf16.mxu0 0
  %117 = vmatpush1.bf16.msra.mxu0 0
  %118 = vmatprep.subr.bf16.mxu0 0
  %119 = vmatpush1.bf16.msra.mxu0 0
  %120 = vmatprep.subr.bf16.mxu0 0
  %121 = vmatpush1.bf16.msra.mxu0 0
  %122 = vmatprep.subr.bf16.mxu0 0
  %123 = vmatpush1.bf16.msra.mxu0 0
  %124 = vmatprep.subr.bf16.mxu0 0
  %125 = vmatpush1.bf16.msra.mxu0 %v98
  %126 = vmatprep.subr.bf16.mxu0 0
  %127 = vmatpush1.bf16.msra.mxu0 %v97
  %128 = vmatprep.subr.bf16.mxu0 0
  %129 = vmatpush1.bf16.msra.mxu0 %v96
  %130 = vmatprep.subr.bf16.mxu0 0
  %131 = vmatpush1.bf16.msra.mxu0 %v95
  %132 = vmatprep.subr.bf16.mxu0 0
  %133 = vmatpush2.bf16.msra.mxu0 0
  %134 = vmatprep.subr.bf16.mxu0 0
  %135 = vmatpush2.bf16.msra.mxu0 0
  %136 = vmatprep.subr.bf16.mxu0 0
  %137 = vmatpush2.bf16.msra.mxu0 0
  %138 = vmatprep.subr.bf16.mxu0 0
  %139 = vmatpush2.bf16.msra.mxu0 0
  %140 = vmatprep.subr.bf16.mxu0 0
  %141 = vmatpush2.bf16.msra.mxu0 0
  %142 = vmatprep.subr.bf16.mxu0 0
  %143 = vmatpush2.bf16.msra.mxu0 0
  %144 = vmatprep.subr.bf16.mxu0 0
  %145 = vmatpush2.bf16.msra.mxu0 0
  %146 = vmatprep.subr.bf16.mxu0 0
  %147 = vmatpush2.bf16.msra.mxu0 0
  %148 = vmatprep.mubr.bf16.mxu0 0
  %149 = vmatmul.mubr.bf16.gmra.mxu0 %v105
  %v150 = vpop.f32.mrf.mxu0
  %v151 = vadd.f32 %v77, %v150
  %v152 = vpop.f32.mrf.mxu0
  %v153 = vpop.f32.mrf.mxu0
  %v154 = vadd.f32 %v77, %v153
  %v155 = vpop.f32.mrf.mxu0
  %156 = vmatprep.mubr.bf16.mxu0 0
  %157 = vmatmul.mubr.bf16.gmra.mxu0 %v108
  %v158 = vpop.f32.mrf.mxu0
  %v159 = vadd.f32 %v77, %v158
  %v160 = vpop.f32.mrf.mxu0
  %v161 = vpop.f32.mrf.mxu0
  %v162 = vadd.f32 %v77, %v161
  %v163 = vpop.f32.mrf.mxu0
  %164 = vmatprep.mubr.bf16.mxu0 0
  %165 = vmatmul.mubr.bf16.gmra.mxu0 %v111
  %v166 = vpop.f32.mrf.mxu0
  %v167 = vadd.f32 %v77, %v166
  %v168 = vpop.f32.mrf.mxu0
  %v169 = vpop.f32.mrf.mxu0
  %v170 = vadd.f32 %v77, %v169
  %v171 = vpop.f32.mrf.mxu0
  %172 = vmatprep.mubr.bf16.mxu0 0
  %173 = vmatmul.mubr.bf16.gmra.mxu0 %v114
  %v174 = vpop.f32.mrf.mxu0
  %v175 = vadd.f32 %v77, %v174
  %v176 = vpop.f32.mrf.mxu0
  %v177 = vpop.f32.mrf.mxu0
  %v178 = vadd.f32 %v77, %v177
  %v179 = vpop.f32.mrf.mxu0
  %180 = vdwg.mxu0
  %v181 = vpack.c.bf16 %v154, %v151
  %v182 = vpack.c.bf16 %v162, %v159
  %v183 = vpack.c.bf16 %v170, %v167
  %v184 = vpack.c.bf16 %v178, %v175
  %v185 = vld [vmem:[%s4] sm:$0xff]
  %v186 = vld [vmem:[%s4 + $0x8] sm:$0xff]
  %v187 = vld [vmem:[%s4 + $0x10] sm:$0xff]
  %v188 = vld [vmem:[%s4 + $0x18] sm:$0xff]
  %v189 = vld [vmem:[%s5] sm:$0x3]
  %v191 = vlaneseq
  %v192 = vshrl.u32 %v191, 7
  %v193 = vsub.s32 0, %v192
  %v194 = vrot.slane %v189, %v193
  %v195 = vlaneseq
  %v196 = vshrl.u32 %v195, 7
  %v197 = vsub.s32 1, %v196
  %v198 = vrot.slane %v189, %v197
  %v205 = vunpack.c.l.b16 %v185
  %v206 = vunpack.c.h.b16 %v185
  %v207 = vunpack.c.l.b16 %v186
  %v208 = vunpack.c.h.b16 %v186
  %v209 = vunpack.c.l.b16 %v187
  %v210 = vunpack.c.h.b16 %v187
  %v211 = vunpack.c.l.b16 %v188
  %v212 = vunpack.c.h.b16 %v188
  %v213 = vpack.c.b16 %v207, %v205
  %v214 = vpack.c.b16 %v208, %v206
  %v215 = vpack.c.b16 %v211, %v209
  %v216 = vpack.c.b16 %v212, %v210
  %vm221 = vcmask 261120
  %v223 = vsel %vm221, %v181, 0
  %v226 = vsel %vm221, %v182, 0
  %v229 = vsel %vm221, %v183, 0
  %v232 = vsel %vm221, %v184, 0
  %234 = vmatprep.subr.bf16.mxu0 0
  %235 = vmatpush1.bf16.msra.mxu0 0
  %236 = vmatprep.subr.bf16.mxu0 0
  %237 = vmatpush1.bf16.msra.mxu0 0
  %238 = vmatprep.subr.bf16.mxu0 0
  %239 = vmatpush1.bf16.msra.mxu0 0
  %240 = vmatprep.subr.bf16.mxu0 0
  %241 = vmatpush1.bf16.msra.mxu0 0
  %242 = vmatprep.subr.bf16.mxu0 0
  %243 = vmatpush1.bf16.msra.mxu0 0
  %244 = vmatprep.subr.bf16.mxu0 0
  %245 = vmatpush1.bf16.msra.mxu0 0
  %246 = vmatprep.subr.bf16.mxu0 %v216
  %247 = vmatpush1.bf16.msra.mxu0 %v215
  %248 = vmatprep.subr.bf16.mxu0 %v214
  %249 = vmatpush1.bf16.msra.mxu0 %v213
  %250 = vmatprep.subr.bf16.mxu0 0
  %251 = vmatpush2.bf16.msra.mxu0 0
  %252 = vmatprep.subr.bf16.mxu0 0
  %253 = vmatpush2.bf16.msra.mxu0 0
  %254 = vmatprep.subr.bf16.mxu0 0
  %255 = vmatpush2.bf16.msra.mxu0 0
  %256 = vmatprep.subr.bf16.mxu0 0
  %257 = vmatpush2.bf16.msra.mxu0 0
  %258 = vmatprep.subr.bf16.mxu0 0
  %259 = vmatpush2.bf16.msra.mxu0 0
  %260 = vmatprep.subr.bf16.mxu0 0
  %261 = vmatpush2.bf16.msra.mxu0 0
  %262 = vmatprep.subr.bf16.mxu0 0
  %263 = vmatpush2.bf16.msra.mxu0 0
  %264 = vmatprep.subr.bf16.mxu0 0
  %265 = vmatpush2.bf16.msra.mxu0 0
  %266 = vmatprep.mubr.bf16.mxu0 0
  %267 = vmatmul.mubr.bf16.gmra.mxu0 %v223
  %v268 = vpop.f32.mrf.mxu0
  %v269 = vadd.f32 %v194, %v268
  %v270 = vpop.f32.mrf.mxu0
  %v271 = vadd.f32 %v198, %v270
  %v272 = vpop.f32.mrf.mxu0
  %v273 = vadd.f32 %v194, %v272
  %v274 = vpop.f32.mrf.mxu0
  %v275 = vadd.f32 %v198, %v274
  %276 = vmatprep.mubr.bf16.mxu0 0
  %277 = vmatmul.mubr.bf16.gmra.mxu0 %v226
  %v278 = vpop.f32.mrf.mxu0
  %v279 = vadd.f32 %v194, %v278
  %v280 = vpop.f32.mrf.mxu0
  %v281 = vadd.f32 %v198, %v280
  %v282 = vpop.f32.mrf.mxu0
  %v283 = vadd.f32 %v194, %v282
  %v284 = vpop.f32.mrf.mxu0
  %v285 = vadd.f32 %v198, %v284
  %286 = vmatprep.mubr.bf16.mxu0 0
  %287 = vmatmul.mubr.bf16.gmra.mxu0 %v229
  %v288 = vpop.f32.mrf.mxu0
  %v289 = vadd.f32 %v194, %v288
  %v290 = vpop.f32.mrf.mxu0
  %v291 = vadd.f32 %v198, %v290
  %v292 = vpop.f32.mrf.mxu0
  %v293 = vadd.f32 %v194, %v292
  %v294 = vpop.f32.mrf.mxu0
  %v295 = vadd.f32 %v198, %v294
  %296 = vmatprep.mubr.bf16.mxu0 0
  %297 = vmatmul.mubr.bf16.gmra.mxu0 %v232
  %v298 = vpop.f32.mrf.mxu0
  %v299 = vadd.f32 %v194, %v298
  %v300 = vpop.f32.mrf.mxu0
  %v301 = vadd.f32 %v198, %v300
  %v302 = vpop.f32.mrf.mxu0
  %v303 = vadd.f32 %v194, %v302
  %v304 = vpop.f32.mrf.mxu0
  %v305 = vadd.f32 %v198, %v304
  %306 = vdwg.mxu0
  %v307 = vld [vmem:[%s6] sm:$0xff]
  %v308 = vld [vmem:[%s6 + $0x8] sm:$0xff]
  %v309 = vld [vmem:[%s6 + $0x10] sm:$0xff]
  %v310 = vld [vmem:[%s6 + $0x18] sm:$0xff]
  %v311 = vld [vmem:[%s6 + $0x20] sm:$0xff]
  %v312 = vld [vmem:[%s6 + $0x28] sm:$0xff]
  %v313 = vld [vmem:[%s6 + $0x30] sm:$0xff]
  %v314 = vld [vmem:[%s6 + $0x38] sm:$0xff]
  %v315 = vld [vmem:[%s6 + $0x40] sm:$0xff]
  %v316 = vld [vmem:[%s6 + $0x48] sm:$0xff]
  %v317 = vld [vmem:[%s6 + $0x50] sm:$0xff]
  %v318 = vld [vmem:[%s6 + $0x58] sm:$0xff]
  %v319 = vld [vmem:[%s6 + $0x60] sm:$0xff]
  %v320 = vld [vmem:[%s6 + $0x68] sm:$0xff]
  %v321 = vld [vmem:[%s6 + $0x70] sm:$0xff]
  %v322 = vld [vmem:[%s6 + $0x78] sm:$0xff]
  %v323 = vld [vmem:[%s7] sm:$0x1]
  %v325 = vlaneseq
  %v326 = vshrl.u32 %v325, 7
  %v327 = vsub.s32 0, %v326
  %v328 = vrot.slane %v323, %v327
  %v330 = vld [vmem:[%s8] sm:$0x1]
  %v331 = vld [vmem:[#allocation2] sm:$0x1]
  %v332 = vld [vmem:[%s1] sm:$0xff]
  %v334 = vsel %vm103, %v332, 0
  %336 = vmatprep.subr.mxu0 0.0
  %337 = vmatpush1.msra.mxu0 0.0
  %338 = vmatprep.subr.mxu0 0.0
  %339 = vmatpush1.msra.mxu0 0.0
  %340 = vmatprep.subr.mxu0 0.0
  %341 = vmatpush1.msra.mxu0 0.0
  %342 = vmatprep.subr.mxu0 0.0
  %343 = vmatpush1.msra.mxu0 0.0
  %344 = vmatprep.subr.mxu0 0.0
  %345 = vmatpush1.msra.mxu0 0.0
  %346 = vmatprep.subr.mxu0 0.0
  %347 = vmatpush1.msra.mxu0 0.0
  %348 = vmatprep.subr.mxu0 0.0
  %349 = vmatpush1.msra.mxu0 0.0
  %350 = vmatprep.subr.mxu0 0.0
  %351 = vmatpush1.msra.mxu0 0.0
  %352 = vmatprep.subr.mxu0 %v322
  %353 = vmatpush1.msra.mxu0 %v321
  %354 = vmatprep.subr.mxu0 %v320
  %355 = vmatpush1.msra.mxu0 %v319
  %356 = vmatprep.subr.mxu0 %v318
  %357 = vmatpush1.msra.mxu0 %v317
  %358 = vmatprep.subr.mxu0 %v316
  %359 = vmatpush1.msra.mxu0 %v315
  %360 = vmatprep.subr.mxu0 %v314
  %361 = vmatpush1.msra.mxu0 %v313
  %362 = vmatprep.subr.mxu0 %v312
  %363 = vmatpush1.msra.mxu0 %v311
  %364 = vmatprep.subr.mxu0 %v310
  %365 = vmatpush1.msra.mxu0 %v309
  %366 = vmatprep.subr.mxu0 %v308
  %367 = vmatpush1.msra.mxu0 %v307
  %368 = vmatprep.subr.mxu0 0.0
  %369 = vmatpush2.msra.mxu0 0.0
  %370 = vmatprep.subr.mxu0 0.0
  %371 = vmatpush2.msra.mxu0 0.0
  %372 = vmatprep.subr.mxu0 0.0
  %373 = vmatpush2.msra.mxu0 0.0
  %374 = vmatprep.subr.mxu0 0.0
  %375 = vmatpush2.msra.mxu0 0.0
  %376 = vmatprep.subr.mxu0 0.0
  %377 = vmatpush2.msra.mxu0 0.0
  %378 = vmatprep.subr.mxu0 0.0
  %379 = vmatpush2.msra.mxu0 0.0
  %380 = vmatprep.subr.mxu0 0.0
  %381 = vmatpush2.msra.mxu0 0.0
  %382 = vmatprep.subr.mxu0 0.0
  %383 = vmatpush2.msra.mxu0 0.0
  %384 = vmatprep.subr.mxu0 0.0
  %385 = vmatpush2.msra.mxu0 0.0
  %386 = vmatprep.subr.mxu0 0.0
  %387 = vmatpush2.msra.mxu0 0.0
  %388 = vmatprep.subr.mxu0 0.0
  %389 = vmatpush2.msra.mxu0 0.0
  %390 = vmatprep.subr.mxu0 0.0
  %391 = vmatpush2.msra.mxu0 0.0
  %392 = vmatprep.subr.mxu0 0.0
  %393 = vmatpush2.msra.mxu0 0.0
  %394 = vmatprep.subr.mxu0 0.0
  %395 = vmatpush2.msra.mxu0 0.0
  %396 = vmatprep.subr.mxu0 0.0
  %397 = vmatpush2.msra.mxu0 0.0
  %398 = vmatprep.subr.mxu0 0.0
  %399 = vmatpush2.msra.mxu0 0.0
  %400 = vmatprep.mubr.f32.mxu0 0.0
  %401 = vmatmul.mubr.f32.gmra.mxu0 %v334
  %v402 = vpop.f32.mrf.mxu0
  %v403 = vadd.f32 0.0, %v402
  %v404 = vpop.f32.mrf.mxu0
  %v405 = vadd.f32 0.0, %v404
  %406 = vdwg.mxu0
  %v407 = vadd.f32 %v303, %v403
  %v408 = vxor.u32 %v407, 2147483648
  %v409 = vmul.f32 %v408, 1.442695
  %v410 = vpow.pop %v409
  %v411 = vadd.f32 %v410, 1.0
  %v412 = vrcp.pop %v411
  %v413 = vmul.f32 1.0, %v412
  %v414 = vadd.f32 %v405, %v328
  %v415 = vmul.f32 %v413, %v414
  %v416 = vadd.f32 %v305, %v415
  %v417 = vtanh.pop %v416
  %v418 = vsub.f32 1.0, %v413
  %420 = vrot.lane.b32.xlu0 %v417, 64
  %v421 = vpop.permute.xlu0 %420
  %v423 = vmul.f32 %v418, %v421
  %424 = vrot.lane.b32.xlu0 %v332, 64
  %v425 = vpop.permute.xlu0 %424
  %v427 = vmul.f32 %v413, %v425
  %v428 = vadd.f32 %v423, %v427
  %v430 = vlaneseq
  %v431 = vshrl.u32 %v430, 7
  %v432 = vsub.s32 0, %v431
  %v433 = vrot.slane %v330, %v432
  %434 = vrot.lane.b32.xlu0 %v433, 64
  %v435 = vpop.permute.xlu0 %434
  %v437 = vmul.f32 %v428, %v435
  %439 = vrot.lane.b32.xlu0 %v437, 64
  %v440 = vpop.permute.xlu0 %439
  %v442 = vsel %vm103, %v440, 0.0
  %443 = vadd.xlane.f32.xlu0 %v442
  %v444 = vpop.xlane.xlu0 %443
  %v446 = vlaneseq
  %v447 = vshrl.u32 %v446, 7
  %v448 = vsub.s32 0, %v447
  %v449 = vrot.slane %v331, %v448
  %v451 = vadd.f32 %v444, %v449
  %453 = vrot.lane.b32.xlu0 %v428, 64
  %v454 = vpop.permute.xlu0 %453
  %v455 = vsel %vm103, %v454, 0
  %457 = vmatprep.subr.mxu0 0.0
  %458 = vmatpush1.msra.mxu0 0.0
  %459 = vmatprep.subr.mxu0 0.0
  %460 = vmatpush1.msra.mxu0 0.0
  %461 = vmatprep.subr.mxu0 0.0
  %462 = vmatpush1.msra.mxu0 0.0
  %463 = vmatprep.subr.mxu0 0.0
  %464 = vmatpush1.msra.mxu0 0.0
  %465 = vmatprep.subr.mxu0 0.0
  %466 = vmatpush1.msra.mxu0 0.0
  %467 = vmatprep.subr.mxu0 0.0
  %468 = vmatpush1.msra.mxu0 0.0
  %469 = vmatprep.subr.mxu0 0.0
  %470 = vmatpush1.msra.mxu0 0.0
  %471 = vmatprep.subr.mxu0 0.0
  %472 = vmatpush1.msra.mxu0 0.0
  %473 = vmatprep.subr.mxu0 %v322
  %474 = vmatpush1.msra.mxu0 %v321
  %475 = vmatprep.subr.mxu0 %v320
  %476 = vmatpush1.msra.mxu0 %v319
  %477 = vmatprep.subr.mxu0 %v318
  %478 = vmatpush1.msra.mxu0 %v317
  %479 = vmatprep.subr.mxu0 %v316
  %480 = vmatpush1.msra.mxu0 %v315
  %481 = vmatprep.subr.mxu0 %v314
  %482 = vmatpush1.msra.mxu0 %v313
  %483 = vmatprep.subr.mxu0 %v312
  %484 = vmatpush1.msra.mxu0 %v311
  %485 = vmatprep.subr.mxu0 %v310
  %486 = vmatpush1.msra.mxu0 %v309
  %487 = vmatprep.subr.mxu0 %v308
  %488 = vmatpush1.msra.mxu0 %v307
  %489 = vmatprep.subr.mxu0 0.0
  %490 = vmatpush2.msra.mxu0 0.0
  %491 = vmatprep.subr.mxu0 0.0
  %492 = vmatpush2.msra.mxu0 0.0
  %493 = vmatprep.subr.mxu0 0.0
  %494 = vmatpush2.msra.mxu0 0.0
  %495 = vmatprep.subr.mxu0 0.0
  %496 = vmatpush2.msra.mxu0 0.0
  %497 = vmatprep.subr.mxu0 0.0
  %498 = vmatpush2.msra.mxu0 0.0
  %499 = vmatprep.subr.mxu0 0.0
  %500 = vmatpush2.msra.mxu0 0.0
  %501 = vmatprep.subr.mxu0 0.0
  %502 = vmatpush2.msra.mxu0 0.0
  %503 = vmatprep.subr.mxu0 0.0
  %504 = vmatpush2.msra.mxu0 0.0
  %505 = vmatprep.subr.mxu0 0.0
  %506 = vmatpush2.msra.mxu0 0.0
  %507 = vmatprep.subr.mxu0 0.0
  %508 = vmatpush2.msra.mxu0 0.0
  %509 = vmatprep.subr.mxu0 0.0
  %510 = vmatpush2.msra.mxu0 0.0
  %511 = vmatprep.subr.mxu0 0.0
  %512 = vmatpush2.msra.mxu0 0.0
  %513 = vmatprep.subr.mxu0 0.0
  %514 = vmatpush2.msra.mxu0 0.0
  %515 = vmatprep.subr.mxu0 0.0
  %516 = vmatpush2.msra.mxu0 0.0
  %517 = vmatprep.subr.mxu0 0.0
  %518 = vmatpush2.msra.mxu0 0.0
  %519 = vmatprep.subr.mxu0 0.0
  %520 = vmatpush2.msra.mxu0 0.0
  %521 = vmatprep.mubr.f32.mxu0 0.0
  %522 = vmatmul.mubr.f32.gmra.mxu0 %v455
  %v523 = vpop.f32.mrf.mxu0
  %v524 = vadd.f32 0.0, %v523
  %v525 = vpop.f32.mrf.mxu0
  %v526 = vadd.f32 0.0, %v525
  %527 = vdwg.mxu0
  %v528 = vadd.f32 %v299, %v524
  %v529 = vxor.u32 %v528, 2147483648
  %v530 = vmul.f32 %v529, 1.442695
  %v531 = vpow.pop %v530
  %v532 = vadd.f32 %v531, 1.0
  %v533 = vrcp.pop %v532
  %v534 = vmul.f32 1.0, %v533
  %v535 = vadd.f32 %v526, %v328
  %v536 = vmul.f32 %v534, %v535
  %v537 = vadd.f32 %v301, %v536
  %v538 = vtanh.pop %v537
  %v539 = vsub.f32 1.0, %v534
  %541 = vrot.lane.b32.xlu0 %v538, 64
  %v542 = vpop.permute.xlu0 %541
  %v544 = vmul.f32 %v539, %v542
  %v545 = vmul.f32 %v534, %v428
  %v546 = vadd.f32 %v544, %v545
  %v547 = vmul.f32 %v546, %v435
  %549 = vrot.lane.b32.xlu0 %v547, 64
  %v550 = vpop.permute.xlu0 %549
  %v552 = vsel %vm103, %v550, 0.0
  %553 = vadd.xlane.f32.xlu0 %v552
  %v554 = vpop.xlane.xlu0 %553
  %v555 = vadd.f32 %v554, %v449
  %557 = vrot.lane.b32.xlu0 %v546, 64
  %v558 = vpop.permute.xlu0 %557
  %v559 = vsel %vm103, %v558, 0
  %561 = vmatprep.subr.mxu0 0.0
  %562 = vmatpush1.msra.mxu0 0.0
  %563 = vmatprep.subr.mxu0 0.0
  %564 = vmatpush1.msra.mxu0 0.0
  %565 = vmatprep.subr.mxu0 0.0
  %566 = vmatpush1.msra.mxu0 0.0
  %567 = vmatprep.subr.mxu0 0.0
  %568 = vmatpush1.msra.mxu0 0.0
  %569 = vmatprep.subr.mxu0 0.0
  %570 = vmatpush1.msra.mxu0 0.0
  %571 = vmatprep.subr.mxu0 0.0
  %572 = vmatpush1.msra.mxu0 0.0
  %573 = vmatprep.subr.mxu0 0.0
  %574 = vmatpush1.msra.mxu0 0.0
  %575 = vmatprep.subr.mxu0 0.0
  %576 = vmatpush1.msra.mxu0 0.0
  %577 = vmatprep.subr.mxu0 %v322
  %578 = vmatpush1.msra.mxu0 %v321
  %579 = vmatprep.subr.mxu0 %v320
  %580 = vmatpush1.msra.mxu0 %v319
  %581 = vmatprep.subr.mxu0 %v318
  %582 = vmatpush1.msra.mxu0 %v317
  %583 = vmatprep.subr.mxu0 %v316
  %584 = vmatpush1.msra.mxu0 %v315
  %585 = vmatprep.subr.mxu0 %v314
  %586 = vmatpush1.msra.mxu0 %v313
  %587 = vmatprep.subr.mxu0 %v312
  %588 = vmatpush1.msra.mxu0 %v311
  %589 = vmatprep.subr.mxu0 %v310
  %590 = vmatpush1.msra.mxu0 %v309
  %591 = vmatprep.subr.mxu0 %v308
  %592 = vmatpush1.msra.mxu0 %v307
  %593 = vmatprep.subr.mxu0 0.0
  %594 = vmatpush2.msra.mxu0 0.0
  %595 = vmatprep.subr.mxu0 0.0
  %596 = vmatpush2.msra.mxu0 0.0
  %597 = vmatprep.subr.mxu0 0.0
  %598 = vmatpush2.msra.mxu0 0.0
  %599 = vmatprep.subr.mxu0 0.0
  %600 = vmatpush2.msra.mxu0 0.0
  %601 = vmatprep.subr.mxu0 0.0
  %602 = vmatpush2.msra.mxu0 0.0
  %603 = vmatprep.subr.mxu0 0.0
  %604 = vmatpush2.msra.mxu0 0.0
  %605 = vmatprep.subr.mxu0 0.0
  %606 = vmatpush2.msra.mxu0 0.0
  %607 = vmatprep.subr.mxu0 0.0
  %608 = vmatpush2.msra.mxu0 0.0
  %609 = vmatprep.subr.mxu0 0.0
  %610 = vmatpush2.msra.mxu0 0.0
  %611 = vmatprep.subr.mxu0 0.0
  %612 = vmatpush2.msra.mxu0 0.0
  %613 = vmatprep.subr.mxu0 0.0
  %614 = vmatpush2.msra.mxu0 0.0
  %615 = vmatprep.subr.mxu0 0.0
  %616 = vmatpush2.msra.mxu0 0.0
  %617 = vmatprep.subr.mxu0 0.0
  %618 = vmatpush2.msra.mxu0 0.0
  %619 = vmatprep.subr.mxu0 0.0
  %620 = vmatpush2.msra.mxu0 0.0
  %621 = vmatprep.subr.mxu0 0.0
  %622 = vmatpush2.msra.mxu0 0.0
  %623 = vmatprep.subr.mxu0 0.0
  %624 = vmatpush2.msra.mxu0 0.0
  %625 = vmatprep.mubr.f32.mxu0 0.0
  %626 = vmatmul.mubr.f32.gmra.mxu0 %v559
  %v627 = vpop.f32.mrf.mxu0
  %v628 = vadd.f32 0.0, %v627
  %v629 = vpop.f32.mrf.mxu0
  %v630 = vadd.f32 0.0, %v629
  %631 = vdwg.mxu0
  %v632 = vadd.f32 %v293, %v628
  %v633 = vxor.u32 %v632, 2147483648
  %v634 = vmul.f32 %v633, 1.442695
  %v635 = vpow.pop %v634
  %v636 = vadd.f32 %v635, 1.0
  %v637 = vrcp.pop %v636
  %v638 = vmul.f32 1.0, %v637
  %v639 = vadd.f32 %v630, %v328
  %v640 = vmul.f32 %v638, %v639
  %v641 = vadd.f32 %v295, %v640
  %v642 = vtanh.pop %v641
  %v643 = vsub.f32 1.0, %v638
  %645 = vrot.lane.b32.xlu0 %v642, 64
  %v646 = vpop.permute.xlu0 %645
  %v648 = vmul.f32 %v643, %v646
  %v649 = vmul.f32 %v638, %v546
  %v650 = vadd.f32 %v648, %v649
  %v651 = vmul.f32 %v650, %v435
  %653 = vrot.lane.b32.xlu0 %v651, 64
  %v654 = vpop.permute.xlu0 %653
  %v656 = vsel %vm103, %v654, 0.0
  %657 = vadd.xlane.f32.xlu0 %v656
  %v658 = vpop.xlane.xlu0 %657
  %v659 = vadd.f32 %v658, %v449
  %661 = vrot.lane.b32.xlu0 %v650, 64
  %v662 = vpop.permute.xlu0 %661
  %v663 = vsel %vm103, %v662, 0
  %665 = vmatprep.subr.mxu0 0.0
  %666 = vmatpush1.msra.mxu0 0.0
  %667 = vmatprep.subr.mxu0 0.0
  %668 = vmatpush1.msra.mxu0 0.0
  %669 = vmatprep.subr.mxu0 0.0
  %670 = vmatpush1.msra.mxu0 0.0
  %671 = vmatprep.subr.mxu0 0.0
  %672 = vmatpush1.msra.mxu0 0.0
  %673 = vmatprep.subr.mxu0 0.0
  %674 = vmatpush1.msra.mxu0 0.0
  %675 = vmatprep.subr.mxu0 0.0
  %676 = vmatpush1.msra.mxu0 0.0
  %677 = vmatprep.subr.mxu0 0.0
  %678 = vmatpush1.msra.mxu0 0.0
  %679 = vmatprep.subr.mxu0 0.0
  %680 = vmatpush1.msra.mxu0 0.0
  %681 = vmatprep.subr.mxu0 %v322
  %682 = vmatpush1.msra.mxu0 %v321
  %683 = vmatprep.subr.mxu0 %v320
  %684 = vmatpush1.msra.mxu0 %v319
  %685 = vmatprep.subr.mxu0 %v318
  %686 = vmatpush1.msra.mxu0 %v317
  %687 = vmatprep.subr.mxu0 %v316
  %688 = vmatpush1.msra.mxu0 %v315
  %689 = vmatprep.subr.mxu0 %v314
  %690 = vmatpush1.msra.mxu0 %v313
  %691 = vmatprep.subr.mxu0 %v312
  %692 = vmatpush1.msra.mxu0 %v311
  %693 = vmatprep.subr.mxu0 %v310
  %694 = vmatpush1.msra.mxu0 %v309
  %695 = vmatprep.subr.mxu0 %v308
  %696 = vmatpush1.msra.mxu0 %v307
  %697 = vmatprep.subr.mxu0 0.0
  %698 = vmatpush2.msra.mxu0 0.0
  %699 = vmatprep.subr.mxu0 0.0
  %700 = vmatpush2.msra.mxu0 0.0
  %701 = vmatprep.subr.mxu0 0.0
  %702 = vmatpush2.msra.mxu0 0.0
  %703 = vmatprep.subr.mxu0 0.0
  %704 = vmatpush2.msra.mxu0 0.0
  %705 = vmatprep.subr.mxu0 0.0
  %706 = vmatpush2.msra.mxu0 0.0
  %707 = vmatprep.subr.mxu0 0.0
  %708 = vmatpush2.msra.mxu0 0.0
  %709 = vmatprep.subr.mxu0 0.0
  %710 = vmatpush2.msra.mxu0 0.0
  %711 = vmatprep.subr.mxu0 0.0
  %712 = vmatpush2.msra.mxu0 0.0
  %713 = vmatprep.subr.mxu0 0.0
  %714 = vmatpush2.msra.mxu0 0.0
  %715 = vmatprep.subr.mxu0 0.0
  %716 = vmatpush2.msra.mxu0 0.0
  %717 = vmatprep.subr.mxu0 0.0
  %718 = vmatpush2.msra.mxu0 0.0
  %719 = vmatprep.subr.mxu0 0.0
  %720 = vmatpush2.msra.mxu0 0.0
  %721 = vmatprep.subr.mxu0 0.0
  %722 = vmatpush2.msra.mxu0 0.0
  %723 = vmatprep.subr.mxu0 0.0
  %724 = vmatpush2.msra.mxu0 0.0
  %725 = vmatprep.subr.mxu0 0.0
  %726 = vmatpush2.msra.mxu0 0.0
  %727 = vmatprep.subr.mxu0 0.0
  %728 = vmatpush2.msra.mxu0 0.0
  %729 = vmatprep.mubr.f32.mxu0 0.0
  %730 = vmatmul.mubr.f32.gmra.mxu0 %v663
  %v731 = vpop.f32.mrf.mxu0
  %v732 = vadd.f32 0.0, %v731
  %v733 = vpop.f32.mrf.mxu0
  %v734 = vadd.f32 0.0, %v733
  %735 = vdwg.mxu0
  %v736 = vadd.f32 %v289, %v732
  %v737 = vxor.u32 %v736, 2147483648
  %v738 = vmul.f32 %v737, 1.442695
  %v739 = vpow.pop %v738
  %v740 = vadd.f32 %v739, 1.0
  %v741 = vrcp.pop %v740
  %v742 = vmul.f32 1.0, %v741
  %v743 = vadd.f32 %v734, %v328
  %v744 = vmul.f32 %v742, %v743
  %v745 = vadd.f32 %v291, %v744
  %v746 = vtanh.pop %v745
  %v747 = vsub.f32 1.0, %v742
  %749 = vrot.lane.b32.xlu0 %v746, 64
  %v750 = vpop.permute.xlu0 %749
  %v752 = vmul.f32 %v747, %v750
  %v753 = vmul.f32 %v742, %v650
  %v754 = vadd.f32 %v752, %v753
  %v755 = vmul.f32 %v754, %v435
  %757 = vrot.lane.b32.xlu0 %v755, 64
  %v758 = vpop.permute.xlu0 %757
  %v760 = vsel %vm103, %v758, 0.0
  %761 = vadd.xlane.f32.xlu0 %v760
  %v762 = vpop.xlane.xlu0 %761
  %v763 = vadd.f32 %v762, %v449
  %765 = vrot.lane.b32.xlu0 %v754, 64
  %v766 = vpop.permute.xlu0 %765
  %v767 = vsel %vm103, %v766, 0
  %769 = vmatprep.subr.mxu0 0.0
  %770 = vmatpush1.msra.mxu0 0.0
  %771 = vmatprep.subr.mxu0 0.0
  %772 = vmatpush1.msra.mxu0 0.0
  %773 = vmatprep.subr.mxu0 0.0
  %774 = vmatpush1.msra.mxu0 0.0
  %775 = vmatprep.subr.mxu0 0.0
  %776 = vmatpush1.msra.mxu0 0.0
  %777 = vmatprep.subr.mxu0 0.0
  %778 = vmatpush1.msra.mxu0 0.0
  %779 = vmatprep.subr.mxu0 0.0
  %780 = vmatpush1.msra.mxu0 0.0
  %781 = vmatprep.subr.mxu0 0.0
  %782 = vmatpush1.msra.mxu0 0.0
  %783 = vmatprep.subr.mxu0 0.0
  %784 = vmatpush1.msra.mxu0 0.0
  %785 = vmatprep.subr.mxu0 %v322
  %786 = vmatpush1.msra.mxu0 %v321
  %787 = vmatprep.subr.mxu0 %v320
  %788 = vmatpush1.msra.mxu0 %v319
  %789 = vmatprep.subr.mxu0 %v318
  %790 = vmatpush1.msra.mxu0 %v317
  %791 = vmatprep.subr.mxu0 %v316
  %792 = vmatpush1.msra.mxu0 %v315
  %793 = vmatprep.subr.mxu0 %v314
  %794 = vmatpush1.msra.mxu0 %v313
  %795 = vmatprep.subr.mxu0 %v312
  %796 = vmatpush1.msra.mxu0 %v311
  %797 = vmatprep.subr.mxu0 %v310
  %798 = vmatpush1.msra.mxu0 %v309
  %799 = vmatprep.subr.mxu0 %v308
  %800 = vmatpush1.msra.mxu0 %v307
  %801 = vmatprep.subr.mxu0 0.0
  %802 = vmatpush2.msra.mxu0 0.0
  %803 = vmatprep.subr.mxu0 0.0
  %804 = vmatpush2.msra.mxu0 0.0
  %805 = vmatprep.subr.mxu0 0.0
  %806 = vmatpush2.msra.mxu0 0.0
  %807 = vmatprep.subr.mxu0 0.0
  %808 = vmatpush2.msra.mxu0 0.0
  %809 = vmatprep.subr.mxu0 0.0
  %810 = vmatpush2.msra.mxu0 0.0
  %811 = vmatprep.subr.mxu0 0.0
  %812 = vmatpush2.msra.mxu0 0.0
  %813 = vmatprep.subr.mxu0 0.0
  %814 = vmatpush2.msra.mxu0 0.0
  %815 = vmatprep.subr.mxu0 0.0
  %816 = vmatpush2.msra.mxu0 0.0
  %817 = vmatprep.subr.mxu0 0.0
  %818 = vmatpush2.msra.mxu0 0.0
  %819 = vmatprep.subr.mxu0 0.0
  %820 = vmatpush2.msra.mxu0 0.0
  %821 = vmatprep.subr.mxu0 0.0
  %822 = vmatpush2.msra.mxu0 0.0
  %823 = vmatprep.subr.mxu0 0.0
  %824 = vmatpush2.msra.mxu0 0.0
  %825 = vmatprep.subr.mxu0 0.0
  %826 = vmatpush2.msra.mxu0 0.0
  %827 = vmatprep.subr.mxu0 0.0
  %828 = vmatpush2.msra.mxu0 0.0
  %829 = vmatprep.subr.mxu0 0.0
  %830 = vmatpush2.msra.mxu0 0.0
  %831 = vmatprep.subr.mxu0 0.0
  %832 = vmatpush2.msra.mxu0 0.0
  %833 = vmatprep.mubr.f32.mxu0 0.0
  %834 = vmatmul.mubr.f32.gmra.mxu0 %v767
  %v835 = vpop.f32.mrf.mxu0
  %v836 = vadd.f32 0.0, %v835
  %v837 = vpop.f32.mrf.mxu0
  %v838 = vadd.f32 0.0, %v837
  %839 = vdwg.mxu0
  %v840 = vadd.f32 %v283, %v836
  %v841 = vxor.u32 %v840, 2147483648
  %v842 = vmul.f32 %v841, 1.442695
  %v843 = vpow.pop %v842
  %v844 = vadd.f32 %v843, 1.0
  %v845 = vrcp.pop %v844
  %v846 = vmul.f32 1.0, %v845
  %v847 = vadd.f32 %v838, %v328
  %v848 = vmul.f32 %v846, %v847
  %v849 = vadd.f32 %v285, %v848
  %v850 = vtanh.pop %v849
  %v851 = vsub.f32 1.0, %v846
  %853 = vrot.lane.b32.xlu0 %v850, 64
  %v854 = vpop.permute.xlu0 %853
  %v856 = vmul.f32 %v851, %v854
  %v857 = vmul.f32 %v846, %v754
  %v858 = vadd.f32 %v856, %v857
  %v859 = vmul.f32 %v858, %v435
  %861 = vrot.lane.b32.xlu0 %v859, 64
  %v862 = vpop.permute.xlu0 %861
  %v864 = vsel %vm103, %v862, 0.0
  %865 = vadd.xlane.f32.xlu0 %v864
  %v866 = vpop.xlane.xlu0 %865
  %v867 = vadd.f32 %v866, %v449
  %869 = vrot.lane.b32.xlu0 %v858, 64
  %v870 = vpop.permute.xlu0 %869
  %v871 = vsel %vm103, %v870, 0
  %873 = vmatprep.subr.mxu0 0.0
  %874 = vmatpush1.msra.mxu0 0.0
  %875 = vmatprep.subr.mxu0 0.0
  %876 = vmatpush1.msra.mxu0 0.0
  %877 = vmatprep.subr.mxu0 0.0
  %878 = vmatpush1.msra.mxu0 0.0
  %879 = vmatprep.subr.mxu0 0.0
  %880 = vmatpush1.msra.mxu0 0.0
  %881 = vmatprep.subr.mxu0 0.0
  %882 = vmatpush1.msra.mxu0 0.0
  %883 = vmatprep.subr.mxu0 0.0
  %884 = vmatpush1.msra.mxu0 0.0
  %885 = vmatprep.subr.mxu0 0.0
  %886 = vmatpush1.msra.mxu0 0.0
  %887 = vmatprep.subr.mxu0 0.0
  %888 = vmatpush1.msra.mxu0 0.0
  %889 = vmatprep.subr.mxu0 %v322
  %890 = vmatpush1.msra.mxu0 %v321
  %891 = vmatprep.subr.mxu0 %v320
  %892 = vmatpush1.msra.mxu0 %v319
  %893 = vmatprep.subr.mxu0 %v318
  %894 = vmatpush1.msra.mxu0 %v317
  %895 = vmatprep.subr.mxu0 %v316
  %896 = vmatpush1.msra.mxu0 %v315
  %897 = vmatprep.subr.mxu0 %v314
  %898 = vmatpush1.msra.mxu0 %v313
  %899 = vmatprep.subr.mxu0 %v312
  %900 = vmatpush1.msra.mxu0 %v311
  %901 = vmatprep.subr.mxu0 %v310
  %902 = vmatpush1.msra.mxu0 %v309
  %903 = vmatprep.subr.mxu0 %v308
  %904 = vmatpush1.msra.mxu0 %v307
  %905 = vmatprep.subr.mxu0 0.0
  %906 = vmatpush2.msra.mxu0 0.0
  %907 = vmatprep.subr.mxu0 0.0
  %908 = vmatpush2.msra.mxu0 0.0
  %909 = vmatprep.subr.mxu0 0.0
  %910 = vmatpush2.msra.mxu0 0.0
  %911 = vmatprep.subr.mxu0 0.0
  %912 = vmatpush2.msra.mxu0 0.0
  %913 = vmatprep.subr.mxu0 0.0
  %914 = vmatpush2.msra.mxu0 0.0
  %915 = vmatprep.subr.mxu0 0.0
  %916 = vmatpush2.msra.mxu0 0.0
  %917 = vmatprep.subr.mxu0 0.0
  %918 = vmatpush2.msra.mxu0 0.0
  %919 = vmatprep.subr.mxu0 0.0
  %920 = vmatpush2.msra.mxu0 0.0
  %921 = vmatprep.subr.mxu0 0.0
  %922 = vmatpush2.msra.mxu0 0.0
  %923 = vmatprep.subr.mxu0 0.0
  %924 = vmatpush2.msra.mxu0 0.0
  %925 = vmatprep.subr.mxu0 0.0
  %926 = vmatpush2.msra.mxu0 0.0
  %927 = vmatprep.subr.mxu0 0.0
  %928 = vmatpush2.msra.mxu0 0.0
  %929 = vmatprep.subr.mxu0 0.0
  %930 = vmatpush2.msra.mxu0 0.0
  %931 = vmatprep.subr.mxu0 0.0
  %932 = vmatpush2.msra.mxu0 0.0
  %933 = vmatprep.subr.mxu0 0.0
  %934 = vmatpush2.msra.mxu0 0.0
  %935 = vmatprep.subr.mxu0 0.0
  %936 = vmatpush2.msra.mxu0 0.0
  %937 = vmatprep.mubr.f32.mxu0 0.0
  %938 = vmatmul.mubr.f32.gmra.mxu0 %v871
  %v939 = vpop.f32.mrf.mxu0
  %v940 = vadd.f32 0.0, %v939
  %v941 = vpop.f32.mrf.mxu0
  %v942 = vadd.f32 0.0, %v941
  %943 = vdwg.mxu0
  %v944 = vadd.f32 %v279, %v940
  %v945 = vxor.u32 %v944, 2147483648
  %v946 = vmul.f32 %v945, 1.442695
  %v947 = vpow.pop %v946
  %v948 = vadd.f32 %v947, 1.0
  %v949 = vrcp.pop %v948
  %v950 = vmul.f32 1.0, %v949
  %v951 = vadd.f32 %v942, %v328
  %v952 = vmul.f32 %v950, %v951
  %v953 = vadd.f32 %v281, %v952
  %v954 = vtanh.pop %v953
  %v955 = vsub.f32 1.0, %v950
  %957 = vrot.lane.b32.xlu0 %v954, 64
  %v958 = vpop.permute.xlu0 %957
  %v960 = vmul.f32 %v955, %v958
  %v961 = vmul.f32 %v950, %v858
  %v962 = vadd.f32 %v960, %v961
  %v963 = vmul.f32 %v962, %v435
  %965 = vrot.lane.b32.xlu0 %v963, 64
  %v966 = vpop.permute.xlu0 %965
  %v968 = vsel %vm103, %v966, 0.0
  %969 = vadd.xlane.f32.xlu0 %v968
  %v970 = vpop.xlane.xlu0 %969
  %v971 = vadd.f32 %v970, %v449
  %973 = vrot.lane.b32.xlu0 %v962, 64
  %v974 = vpop.permute.xlu0 %973
  %v975 = vsel %vm103, %v974, 0
  %977 = vmatprep.subr.mxu0 0.0
  %978 = vmatpush1.msra.mxu0 0.0
  %979 = vmatprep.subr.mxu0 0.0
  %980 = vmatpush1.msra.mxu0 0.0
  %981 = vmatprep.subr.mxu0 0.0
  %982 = vmatpush1.msra.mxu0 0.0
  %983 = vmatprep.subr.mxu0 0.0
  %984 = vmatpush1.msra.mxu0 0.0
  %985 = vmatprep.subr.mxu0 0.0
  %986 = vmatpush1.msra.mxu0 0.0
  %987 = vmatprep.subr.mxu0 0.0
  %988 = vmatpush1.msra.mxu0 0.0
  %989 = vmatprep.subr.mxu0 0.0
  %990 = vmatpush1.msra.mxu0 0.0
  %991 = vmatprep.subr.mxu0 0.0
  %992 = vmatpush1.msra.mxu0 0.0
  %993 = vmatprep.subr.mxu0 %v322
  %994 = vmatpush1.msra.mxu0 %v321
  %995 = vmatprep.subr.mxu0 %v320
  %996 = vmatpush1.msra.mxu0 %v319
  %997 = vmatprep.subr.mxu0 %v318
  %998 = vmatpush1.msra.mxu0 %v317
  %999 = vmatprep.subr.mxu0 %v316
  %1000 = vmatpush1.msra.mxu0 %v315
  %1001 = vmatprep.subr.mxu0 %v314
  %1002 = vmatpush1.msra.mxu0 %v313
  %1003 = vmatprep.subr.mxu0 %v312
  %1004 = vmatpush1.msra.mxu0 %v311
  %1005 = vmatprep.subr.mxu0 %v310
  %1006 = vmatpush1.msra.mxu0 %v309
  %1007 = vmatprep.subr.mxu0 %v308
  %1008 = vmatpush1.msra.mxu0 %v307
  %1009 = vmatprep.subr.mxu0 0.0
  %1010 = vmatpush2.msra.mxu0 0.0
  %1011 = vmatprep.subr.mxu0 0.0
  %1012 = vmatpush2.msra.mxu0 0.0
  %1013 = vmatprep.subr.mxu0 0.0
  %1014 = vmatpush2.msra.mxu0 0.0
  %1015 = vmatprep.subr.mxu0 0.0
  %1016 = vmatpush2.msra.mxu0 0.0
  %1017 = vmatprep.subr.mxu0 0.0
  %1018 = vmatpush2.msra.mxu0 0.0
  %1019 = vmatprep.subr.mxu0 0.0
  %1020 = vmatpush2.msra.mxu0 0.0
  %1021 = vmatprep.subr.mxu0 0.0
  %1022 = vmatpush2.msra.mxu0 0.0
  %1023 = vmatprep.subr.mxu0 0.0
  %1024 = vmatpush2.msra.mxu0 0.0
  %1025 = vmatprep.subr.mxu0 0.0
  %1026 = vmatpush2.msra.mxu0 0.0
  %1027 = vmatprep.subr.mxu0 0.0
  %1028 = vmatpush2.msra.mxu0 0.0
  %1029 = vmatprep.subr.mxu0 0.0
  %1030 = vmatpush2.msra.mxu0 0.0
  %1031 = vmatprep.subr.mxu0 0.0
  %1032 = vmatpush2.msra.mxu0 0.0
  %1033 = vmatprep.subr.mxu0 0.0
  %1034 = vmatpush2.msra.mxu0 0.0
  %1035 = vmatprep.subr.mxu0 0.0
  %1036 = vmatpush2.msra.mxu0 0.0
  %1037 = vmatprep.subr.mxu0 0.0
  %1038 = vmatpush2.msra.mxu0 0.0
  %1039 = vmatprep.subr.mxu0 0.0
  %1040 = vmatpush2.msra.mxu0 0.0
  %1041 = vmatprep.mubr.f32.mxu0 0.0
  %1042 = vmatmul.mubr.f32.gmra.mxu0 %v975
  %v1043 = vpop.f32.mrf.mxu0
  %v1044 = vadd.f32 0.0, %v1043
  %v1045 = vpop.f32.mrf.mxu0
  %v1046 = vadd.f32 0.0, %v1045
  %1047 = vdwg.mxu0
  %v1048 = vadd.f32 %v273, %v1044
  %v1049 = vxor.u32 %v1048, 2147483648
  %v1050 = vmul.f32 %v1049, 1.442695
  %v1051 = vpow.pop %v1050
  %v1052 = vadd.f32 %v1051, 1.0
  %v1053 = vrcp.pop %v1052
  %v1054 = vmul.f32 1.0, %v1053
  %v1055 = vadd.f32 %v1046, %v328
  %v1056 = vmul.f32 %v1054, %v1055
  %v1057 = vadd.f32 %v275, %v1056
  %v1058 = vtanh.pop %v1057
  %v1059 = vsub.f32 1.0, %v1054
  %1061 = vrot.lane.b32.xlu0 %v1058, 64
  %v1062 = vpop.permute.xlu0 %1061
  %v1064 = vmul.f32 %v1059, %v1062
  %v1065 = vmul.f32 %v1054, %v962
  %v1066 = vadd.f32 %v1064, %v1065
  %v1067 = vmul.f32 %v1066, %v435
  %1069 = vrot.lane.b32.xlu0 %v1067, 64
  %v1070 = vpop.permute.xlu0 %1069
  %v1072 = vsel %vm103, %v1070, 0.0
  %1073 = vadd.xlane.f32.xlu0 %v1072
  %v1074 = vpop.xlane.xlu0 %1073
  %v1075 = vadd.f32 %v1074, %v449
  %1077 = vrot.lane.b32.xlu0 %v1066, 64
  %v1078 = vpop.permute.xlu0 %1077
  %v1079 = vsel %vm103, %v1078, 0
  %1081 = vmatprep.subr.mxu0 0.0
  %1082 = vmatpush1.msra.mxu0 0.0
  %1083 = vmatprep.subr.mxu0 0.0
  %1084 = vmatpush1.msra.mxu0 0.0
  %1085 = vmatprep.subr.mxu0 0.0
  %1086 = vmatpush1.msra.mxu0 0.0
  %1087 = vmatprep.subr.mxu0 0.0
  %1088 = vmatpush1.msra.mxu0 0.0
  %1089 = vmatprep.subr.mxu0 0.0
  %1090 = vmatpush1.msra.mxu0 0.0
  %1091 = vmatprep.subr.mxu0 0.0
  %1092 = vmatpush1.msra.mxu0 0.0
  %1093 = vmatprep.subr.mxu0 0.0
  %1094 = vmatpush1.msra.mxu0 0.0
  %1095 = vmatprep.subr.mxu0 0.0
  %1096 = vmatpush1.msra.mxu0 0.0
  %1097 = vmatprep.subr.mxu0 %v322
  %1098 = vmatpush1.msra.mxu0 %v321
  %1099 = vmatprep.subr.mxu0 %v320
  %1100 = vmatpush1.msra.mxu0 %v319
  %1101 = vmatprep.subr.mxu0 %v318
  %1102 = vmatpush1.msra.mxu0 %v317
  %1103 = vmatprep.subr.mxu0 %v316
  %1104 = vmatpush1.msra.mxu0 %v315
  %1105 = vmatprep.subr.mxu0 %v314
  %1106 = vmatpush1.msra.mxu0 %v313
  %1107 = vmatprep.subr.mxu0 %v312
  %1108 = vmatpush1.msra.mxu0 %v311
  %1109 = vmatprep.subr.mxu0 %v310
  %1110 = vmatpush1.msra.mxu0 %v309
  %1111 = vmatprep.subr.mxu0 %v308
  %1112 = vmatpush1.msra.mxu0 %v307
  %1113 = vmatprep.subr.mxu0 0.0
  %1114 = vmatpush2.msra.mxu0 0.0
  %1115 = vmatprep.subr.mxu0 0.0
  %1116 = vmatpush2.msra.mxu0 0.0
  %1117 = vmatprep.subr.mxu0 0.0
  %1118 = vmatpush2.msra.mxu0 0.0
  %1119 = vmatprep.subr.mxu0 0.0
  %1120 = vmatpush2.msra.mxu0 0.0
  %1121 = vmatprep.subr.mxu0 0.0
  %1122 = vmatpush2.msra.mxu0 0.0
  %1123 = vmatprep.subr.mxu0 0.0
  %1124 = vmatpush2.msra.mxu0 0.0
  %1125 = vmatprep.subr.mxu0 0.0
  %1126 = vmatpush2.msra.mxu0 0.0
  %1127 = vmatprep.subr.mxu0 0.0
  %1128 = vmatpush2.msra.mxu0 0.0
  %1129 = vmatprep.subr.mxu0 0.0
  %1130 = vmatpush2.msra.mxu0 0.0
  %1131 = vmatprep.subr.mxu0 0.0
  %1132 = vmatpush2.msra.mxu0 0.0
  %1133 = vmatprep.subr.mxu0 0.0
  %1134 = vmatpush2.msra.mxu0 0.0
  %1135 = vmatprep.subr.mxu0 0.0
  %1136 = vmatpush2.msra.mxu0 0.0
  %1137 = vmatprep.subr.mxu0 0.0
  %1138 = vmatpush2.msra.mxu0 0.0
  %1139 = vmatprep.subr.mxu0 0.0
  %1140 = vmatpush2.msra.mxu0 0.0
  %1141 = vmatprep.subr.mxu0 0.0
  %1142 = vmatpush2.msra.mxu0 0.0
  %1143 = vmatprep.subr.mxu0 0.0
  %1144 = vmatpush2.msra.mxu0 0.0
  %1145 = vmatprep.mubr.f32.mxu0 0.0
  %1146 = vmatmul.mubr.f32.gmra.mxu0 %v1079
  %v1147 = vpop.f32.mrf.mxu0
  %v1148 = vadd.f32 0.0, %v1147
  %v1149 = vpop.f32.mrf.mxu0
  %v1150 = vadd.f32 0.0, %v1149
  %1151 = vdwg.mxu0
  %v1152 = vadd.f32 %v269, %v1148
  %v1153 = vxor.u32 %v1152, 2147483648
  %v1154 = vmul.f32 %v1153, 1.442695
  %v1155 = vpow.pop %v1154
  %v1156 = vadd.f32 %v1155, 1.0
  %v1157 = vrcp.pop %v1156
  %v1158 = vmul.f32 1.0, %v1157
  %v1159 = vadd.f32 %v1150, %v328
  %v1160 = vmul.f32 %v1158, %v1159
  %v1161 = vadd.f32 %v271, %v1160
  %v1162 = vtanh.pop %v1161
  %v1163 = vsub.f32 1.0, %v1158
  %1165 = vrot.lane.b32.xlu0 %v1162, 64
  %v1166 = vpop.permute.xlu0 %1165
  %v1168 = vmul.f32 %v1163, %v1166
  %v1169 = vmul.f32 %v1158, %v1066
  %v1170 = vadd.f32 %v1168, %v1169
  %v1171 = vmul.f32 %v1170, %v435
  %1173 = vrot.lane.b32.xlu0 %v1171, 64
  %v1174 = vpop.permute.xlu0 %1173
  %v1176 = vsel %vm103, %v1174, 0.0
  %1177 = vadd.xlane.f32.xlu0 %v1176
  %v1178 = vpop.xlane.xlu0 %1177
  %v1179 = vadd.f32 %v1178, %v449
  %1181 = vrot.lane.b32.xlu0 %v1170, 64
  %v1182 = vpop.permute.xlu0 %1181
  %1184 = vst.msk [vmem:[%s15] sm:$0xff] %vm103, %v1182
  %v1185 = vmax.f32 %v1179, %v1075
  %v1186 = vmax.f32 %v1185, %v971
  %v1187 = vmax.f32 %v1186, %v867
  %v1188 = vmax.f32 %v1187, %v763
  %v1189 = vmax.f32 %v1188, %v659
  %v1190 = vmax.f32 %v1189, %v555
  %v1191 = vmax.f32 %v1190, %v451
  %v1192 = vsub.f32 %v1179, %v1191
  %v1193 = vmul.f32 %v1192, 1.442695
  %v1194 = vpow.pop %v1193
  %v1195 = vsub.f32 %v1075, %v1191
  %v1196 = vmul.f32 %v1195, 1.442695
  %v1197 = vpow.pop %v1196
  %v1198 = vsub.f32 %v971, %v1191
  %v1199 = vmul.f32 %v1198, 1.442695
  %v1200 = vpow.pop %v1199
  %v1201 = vsub.f32 %v867, %v1191
  %v1202 = vmul.f32 %v1201, 1.442695
  %v1203 = vpow.pop %v1202
  %v1204 = vsub.f32 %v763, %v1191
  %v1205 = vmul.f32 %v1204, 1.442695
  %v1206 = vpow.pop %v1205
  %v1207 = vsub.f32 %v659, %v1191
  %v1208 = vmul.f32 %v1207, 1.442695
  %v1209 = vpow.pop %v1208
  %v1210 = vsub.f32 %v555, %v1191
  %v1211 = vmul.f32 %v1210, 1.442695
  %v1212 = vpow.pop %v1211
  %v1213 = vsub.f32 %v451, %v1191
  %v1214 = vmul.f32 %v1213, 1.442695
  %v1215 = vpow.pop %v1214
  %v1216 = vadd.f32 %v1194, %v1197
  %v1217 = vadd.f32 %v1216, %v1200
  %v1218 = vadd.f32 %v1217, %v1203
  %v1219 = vadd.f32 %v1218, %v1206
  %v1220 = vadd.f32 %v1219, %v1209
  %v1221 = vadd.f32 %v1220, %v1212
  %v1222 = vadd.f32 %v1221, %v1215
  %v1223 = vrcp.pop %v1222
  %v1224 = vpack.c.bf16 %v1066, %v1170
  %v1225 = vpack.c.bf16 %v858, %v962
  %v1226 = vpack.c.bf16 %v650, %v754
  %v1227 = vpack.c.bf16 %v428, %v546
  %v1228 = vld [vmem:[%s10] sm:$0xf]
  %v1229 = vld [vmem:[%s10 + $0x4] sm:$0xf]
  %v1230 = vld [vmem:[%s10 + $0x8] sm:$0xf]
  %v1231 = vld [vmem:[%s10 + $0xc] sm:$0xf]
  %v1232 = vld [vmem:[%s10 + $0x10] sm:$0xf]
  %v1233 = vld [vmem:[%s10 + $0x14] sm:$0xf]
  %v1234 = vld [vmem:[%s10 + $0x18] sm:$0xf]
  %v1235 = vld [vmem:[%s10 + $0x1c] sm:$0xf]
  %v1236 = vld [vmem:[%s11] sm:$0x1]
  %v1238 = vlaneseq
  %v1239 = vshrl.u32 %v1238, 7
  %v1240 = vsub.s32 0, %v1239
  %v1241 = vrot.slane %v1236, %v1240
  %1247 = vrot.lane.b32.xlu0 %v1224, 64
  %v1248 = vpop.permute.xlu0 %1247
  %1249 = vrot.lane.b32.xlu0 %v1225, 64
  %v1250 = vpop.permute.xlu0 %1249
  %1251 = vrot.lane.b32.xlu0 %v1226, 64
  %v1252 = vpop.permute.xlu0 %1251
  %1253 = vrot.lane.b32.xlu0 %v1227, 64
  %v1254 = vpop.permute.xlu0 %1253
  %v1263 = vunpack.c.l.b16 %v1228
  %v1264 = vunpack.c.l.b16 %v1229
  %v1265 = vunpack.c.l.b16 %v1230
  %v1266 = vunpack.c.l.b16 %v1231
  %v1267 = vunpack.c.l.b16 %v1232
  %v1268 = vunpack.c.l.b16 %v1233
  %v1269 = vunpack.c.l.b16 %v1234
  %v1270 = vunpack.c.l.b16 %v1235
  %v1271 = vpack.c.b16 %v1264, %v1263
  %v1272 = vpack.c.b16 %v1266, %v1265
  %v1273 = vpack.c.b16 %v1268, %v1267
  %v1274 = vpack.c.b16 %v1270, %v1269
  %v1280 = vsel %vm103, %v1248, 0
  %v1283 = vsel %vm103, %v1250, 0
  %v1286 = vsel %vm103, %v1252, 0
  %v1289 = vsel %vm103, %v1254, 0
  %1291 = vmatprep.subr.bf16.mxu0 0
  %1292 = vmatpush1.bf16.msra.mxu0 0
  %1293 = vmatprep.subr.bf16.mxu0 0
  %1294 = vmatpush1.bf16.msra.mxu0 0
  %1295 = vmatprep.subr.bf16.mxu0 0
  %1296 = vmatpush1.bf16.msra.mxu0 0
  %1297 = vmatprep.subr.bf16.mxu0 0
  %1298 = vmatpush1.bf16.msra.mxu0 0
  %1299 = vmatprep.subr.bf16.mxu0 0
  %1300 = vmatpush1.bf16.msra.mxu0 %v1274
  %1301 = vmatprep.subr.bf16.mxu0 0
  %1302 = vmatpush1.bf16.msra.mxu0 %v1273
  %1303 = vmatprep.subr.bf16.mxu0 0
  %1304 = vmatpush1.bf16.msra.mxu0 %v1272
  %1305 = vmatprep.subr.bf16.mxu0 0
  %1306 = vmatpush1.bf16.msra.mxu0 %v1271
  %1307 = vmatprep.subr.bf16.mxu0 0
  %1308 = vmatpush2.bf16.msra.mxu0 0
  %1309 = vmatprep.subr.bf16.mxu0 0
  %1310 = vmatpush2.bf16.msra.mxu0 0
  %1311 = vmatprep.subr.bf16.mxu0 0
  %1312 = vmatpush2.bf16.msra.mxu0 0
  %1313 = vmatprep.subr.bf16.mxu0 0
  %1314 = vmatpush2.bf16.msra.mxu0 0
  %1315 = vmatprep.subr.bf16.mxu0 0
  %1316 = vmatpush2.bf16.msra.mxu0 0
  %1317 = vmatprep.subr.bf16.mxu0 0
  %1318 = vmatpush2.bf16.msra.mxu0 0
  %1319 = vmatprep.subr.bf16.mxu0 0
  %1320 = vmatpush2.bf16.msra.mxu0 0
  %1321 = vmatprep.subr.bf16.mxu0 0
  %1322 = vmatpush2.bf16.msra.mxu0 0
  %1323 = vmatprep.mubr.bf16.mxu0 0
  %1324 = vmatmul.mubr.bf16.gmra.mxu0 %v1280
  %v1325 = vpop.f32.mrf.mxu0
  %v1326 = vadd.f32 %v1241, %v1325
  %v1327 = vpop.f32.mrf.mxu0
  %v1328 = vpop.f32.mrf.mxu0
  %v1329 = vadd.f32 %v1241, %v1328
  %v1330 = vpop.f32.mrf.mxu0
  %1331 = vmatprep.mubr.bf16.mxu0 0
  %1332 = vmatmul.mubr.bf16.gmra.mxu0 %v1283
  %v1333 = vpop.f32.mrf.mxu0
  %v1334 = vadd.f32 %v1241, %v1333
  %v1335 = vpop.f32.mrf.mxu0
  %v1336 = vpop.f32.mrf.mxu0
  %v1337 = vadd.f32 %v1241, %v1336
  %v1338 = vpop.f32.mrf.mxu0
  %1339 = vmatprep.mubr.bf16.mxu0 0
  %1340 = vmatmul.mubr.bf16.gmra.mxu0 %v1286
  %v1341 = vpop.f32.mrf.mxu0
  %v1342 = vadd.f32 %v1241, %v1341
  %v1343 = vpop.f32.mrf.mxu0
  %v1344 = vpop.f32.mrf.mxu0
  %v1345 = vadd.f32 %v1241, %v1344
  %v1346 = vpop.f32.mrf.mxu0
  %1347 = vmatprep.mubr.bf16.mxu0 0
  %1348 = vmatmul.mubr.bf16.gmra.mxu0 %v1289
  %v1349 = vpop.f32.mrf.mxu0
  %v1350 = vadd.f32 %v1241, %v1349
  %v1351 = vpop.f32.mrf.mxu0
  %v1352 = vpop.f32.mrf.mxu0
  %v1353 = vadd.f32 %v1241, %v1352
  %v1354 = vpop.f32.mrf.mxu0
  %1355 = vdwg.mxu0
  %v1356 = vtanh.pop %v1326
  %v1357 = vtanh.pop %v1329
  %v1358 = vtanh.pop %v1334
  %v1359 = vtanh.pop %v1337
  %v1360 = vtanh.pop %v1342
  %v1361 = vtanh.pop %v1345
  %v1362 = vtanh.pop %v1350
  %v1363 = vtanh.pop %v1353
  %v1364 = vmul.f32 %v1194, %v1223
  %1366 = vset.pattern.permute.xlu0 0
  %1367 = vperm.xlu0 %1366, %v1364
  %v1368 = vpop.permute.xlu0 %1367
  %v1370 = vmul.f32 %v1368, %v1356
  %v1371 = vmul.f32 %v1370, %v151
  %v1372 = vadd.f32 %v1371, 0.0
  %v1373 = vmul.f32 %v1197, %v1223
  %1375 = vset.pattern.permute.xlu0 0
  %1376 = vperm.xlu0 %1375, %v1373
  %v1377 = vpop.permute.xlu0 %1376
  %v1379 = vmul.f32 %v1377, %v1357
  %v1380 = vmul.f32 %v1379, %v154
  %v1381 = vadd.f32 %v1372, %v1380
  %v1382 = vmul.f32 %v1200, %v1223
  %1384 = vset.pattern.permute.xlu0 0
  %1385 = vperm.xlu0 %1384, %v1382
  %v1386 = vpop.permute.xlu0 %1385
  %v1388 = vmul.f32 %v1386, %v1358
  %v1389 = vmul.f32 %v1388, %v159
  %v1390 = vadd.f32 %v1381, %v1389
  %v1391 = vmul.f32 %v1203, %v1223
  %1393 = vset.pattern.permute.xlu0 0
  %1394 = vperm.xlu0 %1393, %v1391
  %v1395 = vpop.permute.xlu0 %1394
  %v1397 = vmul.f32 %v1395, %v1359
  %v1398 = vmul.f32 %v1397, %v162
  %v1399 = vadd.f32 %v1390, %v1398
  %v1400 = vmul.f32 %v1206, %v1223
  %1402 = vset.pattern.permute.xlu0 0
  %1403 = vperm.xlu0 %1402, %v1400
  %v1404 = vpop.permute.xlu0 %1403
  %v1406 = vmul.f32 %v1404, %v1360
  %v1407 = vmul.f32 %v1406, %v167
  %v1408 = vadd.f32 %v1399, %v1407
  %v1409 = vmul.f32 %v1209, %v1223
  %1411 = vset.pattern.permute.xlu0 0
  %1412 = vperm.xlu0 %1411, %v1409
  %v1413 = vpop.permute.xlu0 %1412
  %v1415 = vmul.f32 %v1413, %v1361
  %v1416 = vmul.f32 %v1415, %v170
  %v1417 = vadd.f32 %v1408, %v1416
  %v1418 = vmul.f32 %v1212, %v1223
  %1420 = vset.pattern.permute.xlu0 0
  %1421 = vperm.xlu0 %1420, %v1418
  %v1422 = vpop.permute.xlu0 %1421
  %v1424 = vmul.f32 %v1422, %v1362
  %v1425 = vmul.f32 %v1424, %v175
  %v1426 = vadd.f32 %v1417, %v1425
  %v1427 = vmul.f32 %v1215, %v1223
  %1429 = vset.pattern.permute.xlu0 0
  %1430 = vperm.xlu0 %1429, %v1427
  %v1431 = vpop.permute.xlu0 %1430
  %v1433 = vmul.f32 %v1431, %v1363
  %v1434 = vmul.f32 %v1433, %v178
  %v1435 = vadd.f32 %v1426, %v1434
  %v1436 = vld [vmem:[%s12] sm:$0xff]
  %v1437 = vld [vmem:[%s12 + $0x8] sm:$0xff]
  %v1438 = vld [vmem:[%s12 + $0x10] sm:$0xff]
  %v1439 = vld [vmem:[%s12 + $0x18] sm:$0xff]
  %v1440 = vld [vmem:[%s13] sm:$0x1]
  %v1442 = vlaneseq
  %v1443 = vshrl.u32 %v1442, 7
  %v1444 = vsub.s32 0, %v1443
  %v1445 = vrot.slane %v1440, %v1444
  %v1448 = vsel %vm221, %v1435, 0
  %1450 = vmatprep.subr.mxu0 0.0
  %1451 = vmatpush1.msra.mxu0 0.0
  %1452 = vmatprep.subr.mxu0 0.0
  %1453 = vmatpush1.msra.mxu0 0.0
  %1454 = vmatprep.subr.mxu0 0.0
  %1455 = vmatpush1.msra.mxu0 0.0
  %1456 = vmatprep.subr.mxu0 0.0
  %1457 = vmatpush1.msra.mxu0 0.0
  %1458 = vmatprep.subr.mxu0 0.0
  %1459 = vmatpush1.msra.mxu0 0.0
  %1460 = vmatprep.subr.mxu0 0.0
  %1461 = vmatpush1.msra.mxu0 0.0
  %1462 = vmatprep.subr.mxu0 0.0
  %1463 = vmatpush1.msra.mxu0 0.0
  %1464 = vmatprep.subr.mxu0 0.0
  %1465 = vmatpush1.msra.mxu0 0.0
  %1466 = vmatprep.subr.mxu0 0.0
  %1467 = vmatpush1.msra.mxu0 0.0
  %1468 = vmatprep.subr.mxu0 0.0
  %1469 = vmatpush1.msra.mxu0 0.0
  %1470 = vmatprep.subr.mxu0 0.0
  %1471 = vmatpush1.msra.mxu0 0.0
  %1472 = vmatprep.subr.mxu0 0.0
  %1473 = vmatpush1.msra.mxu0 0.0
  %1474 = vmatprep.subr.mxu0 0.0
  %1475 = vmatpush1.msra.mxu0 %v1439
  %1476 = vmatprep.subr.mxu0 0.0
  %1477 = vmatpush1.msra.mxu0 %v1438
  %1478 = vmatprep.subr.mxu0 0.0
  %1479 = vmatpush1.msra.mxu0 %v1437
  %1480 = vmatprep.subr.mxu0 0.0
  %1481 = vmatpush1.msra.mxu0 %v1436
  %1482 = vmatprep.subr.mxu0 0.0
  %1483 = vmatpush2.msra.mxu0 0.0
  %1484 = vmatprep.subr.mxu0 0.0
  %1485 = vmatpush2.msra.mxu0 0.0
  %1486 = vmatprep.subr.mxu0 0.0
  %1487 = vmatpush2.msra.mxu0 0.0
  %1488 = vmatprep.subr.mxu0 0.0
  %1489 = vmatpush2.msra.mxu0 0.0
  %1490 = vmatprep.subr.mxu0 0.0
  %1491 = vmatpush2.msra.mxu0 0.0
  %1492 = vmatprep.subr.mxu0 0.0
  %1493 = vmatpush2.msra.mxu0 0.0
  %1494 = vmatprep.subr.mxu0 0.0
  %1495 = vmatpush2.msra.mxu0 0.0
  %1496 = vmatprep.subr.mxu0 0.0
  %1497 = vmatpush2.msra.mxu0 0.0
  %1498 = vmatprep.subr.mxu0 0.0
  %1499 = vmatpush2.msra.mxu0 0.0
  %1500 = vmatprep.subr.mxu0 0.0
  %1501 = vmatpush2.msra.mxu0 0.0
  %1502 = vmatprep.subr.mxu0 0.0
  %1503 = vmatpush2.msra.mxu0 0.0
  %1504 = vmatprep.subr.mxu0 0.0
  %1505 = vmatpush2.msra.mxu0 0.0
  %1506 = vmatprep.subr.mxu0 0.0
  %1507 = vmatpush2.msra.mxu0 0.0
  %1508 = vmatprep.subr.mxu0 0.0
  %1509 = vmatpush2.msra.mxu0 0.0
  %1510 = vmatprep.subr.mxu0 0.0
  %1511 = vmatpush2.msra.mxu0 0.0
  %1512 = vmatprep.subr.mxu0 0.0
  %1513 = vmatpush2.msra.mxu0 0.0
  %1514 = vmatprep.mubr.f32.mxu0 0.0
  %1515 = vmatmul.mubr.f32.gmra.mxu0 %v1448
  %v1516 = vpop.f32.mrf.mxu0
  %v1517 = vadd.f32 %v1445, %v1516
  %v1518 = vpop.f32.mrf.mxu0
  %1519 = vdwg.mxu0
  %vm1520 = vcmask 31744
  %v1521 = vsel %vm1520, %v1517, -inf
  %1522 = vmax.xlane.f32.xlu0 %v1521
  %v1523 = vpop.xlane.xlu0 %1522
  %v1524 = vsub.f32 %v1517, %v1523
  %v1525 = vmul.f32 %v1524, 1.442695
  %v1526 = vpow.pop %v1525
  %v1527 = vsel %vm1520, %v1526, 0.0
  %1528 = vadd.xlane.f32.xlu0 %v1527
  %v1529 = vpop.xlane.xlu0 %1528
  %v1530 = vrcp.pop %v1529
  %v1531 = vmul.f32 %v1526, %v1530
  %1532 = vst.msk [vmem:[%s14] sm:$0xff] %vm1520, %v1531
  // Predicated region
  $region58: #{retain_forward.1} parent=0 // pred_check
    _
  $region59: #{retain_forward.1} parent=0 // pred_check_branch
    %1534 = sbr.rel (0) target = $region61
  $region60: #{retain_forward.1} parent=0 // pred_region
    _
  $region61: #{retain_forward.1} parent=0 // pred_fallthru
    _
  // Predicated region
  $region62: #{retain_forward.1} parent=0 // pred_check
    _
  $region63: #{retain_forward.1} parent=0 // pred_check_branch
    %1536 = sbr.rel (0) target = $region65
  $region64: #{retain_forward.1} parent=0 // pred_region
    _
  $region65: #{retain_forward.1} parent=0 // pred_fallthru
    _
  // Predicated region
  $region66: #{retain_forward.1} parent=0 // pred_check
    _
  $region67: #{retain_forward.1} parent=0 // pred_check_branch
    %1538 = sbr.rel (0) target = $region69
  $region68: #{retain_forward.1} parent=0 // pred_region
    _
  $region69: #{retain_forward.1} parent=0 // pred_fallthru
    _
  // Predicated region
  $region70: #{retain_forward.1} parent=0 // pred_check
    _
  $region71: #{retain_forward.1} parent=0 // pred_check_branch
    %1540 = sbr.rel (0) target = $region73
  $region72: #{retain_forward.1} parent=0 // pred_region
    _
  $region73: #{retain_forward.1} parent=0 // pred_fallthru
    _

</llo_original>
